<compile_context>
chip_gen: v6e
topology: v6e:2x2x1
jax: 0.10.0
libtpu: 0.0.40
codegen_flags: <defaults>
</compile_context>

<pallas_src>
import functools

import jax
import jax.numpy as jnp
from jax.experimental import pallas as pl
from jax.experimental.pallas import tpu as pltpu


# ---------------------------------------------------------------------------
# Pallas kernels
# ---------------------------------------------------------------------------

def _mm_kernel(x_ref, w_ref, b_ref, *rest, relu, has_res):
    """bf16 MXU matmul, f32 accumulate, fused bias (+residual) (+ReLU) epilogue."""
    if has_res:
        res_ref, o_ref, acc_ref = rest
    else:
        o_ref, acc_ref = rest

    @pl.when(pl.program_id(2) == 0)
    def _():
        acc_ref[...] = jnp.zeros_like(acc_ref)

    acc_ref[...] += jnp.dot(x_ref[...], w_ref[...],
                            preferred_element_type=jnp.float32)

    @pl.when(pl.program_id(2) == pl.num_programs(2) - 1)
    def _():
        y = acc_ref[...] + b_ref[...]
        if has_res:
            y = y + res_ref[...].astype(jnp.float32)
        if relu:
            y = jnp.maximum(y, 0.0)
        o_ref[...] = y.astype(o_ref.dtype)


def _max9_kernel(*refs):
    # refs = 9 shifted input views + 1 output; running elementwise max (VPU).
    o_ref = refs[-1]
    r = refs[0][...]
    for ref in refs[1:-1]:
        r = jnp.maximum(r, ref[...])
    o_ref[...] = r


def _avgpool_kernel(x_ref, o_ref):
    # (1, HW, C) bf16 -> (1, 1, C) f32 mean  (AdaptiveAvgPool2d((1,1)))
    o_ref[...] = jnp.mean(x_ref[...].astype(jnp.float32), axis=1, keepdims=True)


# ---------------------------------------------------------------------------
# Pallas wrappers
# ---------------------------------------------------------------------------

_MAX_TK = 2048   # keep per-step tiles small enough for v7x's 64 MiB VMEM


def _pick_tk(k_dim):
    """tk = K when it fits; otherwise an exact divisor that is a 128-multiple."""
    if k_dim <= _MAX_TK:
        return k_dim, 1
    for nk in range(2, 65):
        tk = k_dim // nk
        if k_dim % nk == 0 and tk % 128 == 0 and tk <= _MAX_TK:
            return tk, nk
    return k_dim, 1


def matmul_bias_act(x, w, bias, residual=None, relu=True,
                    out_dtype=jnp.bfloat16):
    """y = act((x @ w) + bias [+ residual]).  x:(M,K) bf16, w:(K,N) bf16."""
    M, K = x.shape
    _, N = w.shape
    # Adaptive tiles: no padding of the big activation matrix.  tn capped at
    # 256 so deep layers (N >= 512) still expose >=2 parallel j-tiles for the
    # two v7x TensorCores even when M collapses to a single tile.
    tm = M if M <= 256 else 256
    tn = N if N <= 256 else 256
    tk, nk = _pick_tk(K)
    grid = (pl.cdiv(M, tm), pl.cdiv(N, tn), nk)

    in_specs = [
        pl.BlockSpec((tm, tk), lambda i, j, k: (i, k)),
        pl.BlockSpec((tk, tn), lambda i, j, k: (k, j)),
        pl.BlockSpec((1, tn), lambda i, j, k: (0, j)),
    ]
    args = [x, w, bias.reshape(1, N).astype(jnp.float32)]
    has_res = residual is not None
    if has_res:
        in_specs.append(pl.BlockSpec((tm, tn), lambda i, j, k: (i, j)))
        args.append(residual)

    return pl.pallas_call(
        functools.partial(_mm_kernel, relu=relu, has_res=has_res),
        out_shape=jax.ShapeDtypeStruct((M, N), out_dtype),
        grid_spec=pltpu.PrefetchScalarGridSpec(
            num_scalar_prefetch=0,
            grid=grid,
            in_specs=in_specs,
            out_specs=pl.BlockSpec((tm, tn), lambda i, j, k: (i, j)),
            scratch_shapes=[pltpu.VMEM((tm, tn), jnp.float32)],
        ),
        compiler_params=pltpu.CompilerParams(
            dimension_semantics=("parallel", "parallel", "arbitrary"),
            vmem_limit_bytes=32 * 1024 * 1024),
    )(*args)


def maxpool_3x3_s2(x):
    """MaxPool2d(kernel=3, stride=2, padding=1) on NHWC bf16."""
    B, H, W, C = x.shape
    k, s, pad = 3, 2, 1
    xp = jnp.pad(x, ((0, 0), (pad, pad), (pad, pad), (0, 0)),
                 constant_values=-jnp.inf)
    Ho = (H + 2 * pad - k) // s + 1
    Wo = (W + 2 * pad - k) // s + 1
    M = B * Ho * Wo
    # 9 output-sized tap views combined in one tiled elementwise-max kernel
    # (no 9x stacked patch tensor materialized).
    views = [xp[:, i:i + s * (Ho - 1) + 1:s,
                  j:j + s * (Wo - 1) + 1:s, :].reshape(M, C)
             for i in range(k) for j in range(k)]
    tm = M if M <= 512 else 512
    spec = pl.BlockSpec((tm, C), lambda i: (i, 0))
    out = pl.pallas_call(
        _max9_kernel,
        out_shape=jax.ShapeDtypeStruct((M, C), x.dtype),
        grid_spec=pltpu.PrefetchScalarGridSpec(
            num_scalar_prefetch=0,
            grid=(pl.cdiv(M, tm),),
            in_specs=[spec] * 9,
            out_specs=spec),
        compiler_params=pltpu.CompilerParams(
            dimension_semantics=("parallel",)),
    )(*views)
    return out.reshape(B, Ho, Wo, C)


def avgpool_global(x):
    """AdaptiveAvgPool2d((1,1)) + flatten: NHWC bf16 -> (B, C) float32."""
    B, H, W, C = x.shape
    x2 = x.reshape(B, H * W, C)
    out = pl.pallas_call(
        _avgpool_kernel,
        out_shape=jax.ShapeDtypeStruct((B, 1, C), jnp.float32),
        grid_spec=pltpu.PrefetchScalarGridSpec(
            num_scalar_prefetch=0,
            grid=(B,),
            in_specs=[pl.BlockSpec((1, H * W, C), lambda b: (b, 0, 0))],
            out_specs=pl.BlockSpec((1, 1, C), lambda b: (b, 0, 0))),
        compiler_params=pltpu.CompilerParams(
            dimension_semantics=("parallel",)),
    )(x2)
    return out.reshape(B, C)


# ---------------------------------------------------------------------------
# Convolution via im2col (bf16) + fused Pallas matmul
# ---------------------------------------------------------------------------

def _im2col(x, kh, kw, stride, pad):
    B, H, W, C = x.shape
    xp = jnp.pad(x, ((0, 0), (pad, pad), (pad, pad), (0, 0)))
    Ho = (H + 2 * pad - kh) // stride + 1
    Wo = (W + 2 * pad - kw) // stride + 1
    cols = [xp[:, i:i + stride * (Ho - 1) + 1:stride,
                 j:j + stride * (Wo - 1) + 1:stride, :]
            for i in range(kh) for j in range(kw)]
    patches = jnp.stack(cols, axis=3)                  # (B, Ho, Wo, kh*kw, C)
    return patches.reshape(B * Ho * Wo, kh * kw * C), Ho, Wo


def conv_bn(x, w, bias, stride, pad, relu, residual=None):
    """Conv2d(bias=False)+folded BN (+residual add)(+ReLU). x NHWC bf16, w HWIO bf16."""
    kh, kw, cin, cout = w.shape
    B = x.shape[0]
    if kh == 1 and kw == 1 and pad == 0:
        # TODO(synk): the strided-slice copy on the stride-2 downsample path
        #             could be folded into the matmul's M index map instead.
        xs = x[:, ::stride, ::stride, :] if stride > 1 else x
        _, Ho, Wo, _ = xs.shape
        xm = xs.reshape(B * Ho * Wo, cin)
    else:
        # TODO(synk): 3x3 convs still materialize bf16 im2col patches; a true
        #             implicit-GEMM tap axis would remove the remaining blowup.
        xm, Ho, Wo = _im2col(x, kh, kw, stride, pad)
    res_m = None
    if residual is not None:
        res_m = residual.reshape(B * Ho * Wo, cout)
    y = matmul_bias_act(xm, w.reshape(kh * kw * cin, cout), bias,
                        residual=res_m, relu=relu)
    return y.reshape(B, Ho, Wo, cout)


# ---------------------------------------------------------------------------
# ResNet50 model (Bottleneck, layers = [3, 4, 6, 3])
# ---------------------------------------------------------------------------

def _kaiming(key, shape):
    kh, kw, _, cout = shape
    std = (2.0 / (kh * kw * cout)) ** 0.5   # mode='fan_out', nonlinearity='relu'
    return std * jax.random.normal(key, shape, jnp.float32)


def _fold_bn(w_f32, eps=1e-5):
    """Fold inference-mode BN (init values) into the conv weight (bf16) + f32 bias."""
    cout = w_f32.shape[-1]
    gamma = jnp.ones((cout,), jnp.float32)
    beta = jnp.zeros((cout,), jnp.float32)
    mean = jnp.zeros((cout,), jnp.float32)
    var = jnp.ones((cout,), jnp.float32)
    scale = gamma / jnp.sqrt(var + eps)
    bias = beta - mean * scale
    return (w_f32 * scale).astype(jnp.bfloat16), bias


def make_resnet50_params(key):
    keys = iter(jax.random.split(key, 128))
    w1, b1 = _fold_bn(_kaiming(next(keys), (7, 7, 3, 64)))
    params = {'conv1_w': w1, 'conv1_b': b1}
    layers = []
    inplanes = 64
    cfg = [(64, 3, 1), (128, 4, 2), (256, 6, 2), (512, 3, 2)]
    for planes, blocks, stride in cfg:
        layer = []
        for b in range(blocks):
            s = stride if b == 0 else 1
            blk = {'stride': s}
            blk['w1'], blk['b1'] = _fold_bn(
                _kaiming(next(keys), (1, 1, inplanes, planes)))
            blk['w2'], blk['b2'] = _fold_bn(
                _kaiming(next(keys), (3, 3, planes, planes)))
            blk['w3'], blk['b3'] = _fold_bn(
                _kaiming(next(keys), (1, 1, planes, planes * 4)))
            if b == 0 and (s != 1 or inplanes != planes * 4):
                blk['wd'], blk['bd'] = _fold_bn(
                    _kaiming(next(keys), (1, 1, inplanes, planes * 4)))
            layer.append(blk)
            inplanes = planes * 4
        layers.append(layer)
    params['layers'] = layers
    return params


def bottleneck(x, p):
    s = p['stride']
    out = conv_bn(x, p['w1'], p['b1'], stride=1, pad=0, relu=True)
    out = conv_bn(out, p['w2'], p['b2'], stride=s, pad=1, relu=True)
    if 'wd' in p:
        identity = conv_bn(x, p['wd'], p['bd'], stride=s, pad=0, relu=False)
    else:
        identity = x
    # conv3 + BN + residual add + ReLU fused into a single matmul epilogue.
    return conv_bn(out, p['w3'], p['b3'], stride=1, pad=0, relu=True,
                   residual=identity)


def resnet50_forward(x_nchw, params):
    """Mirrors ResNet50.forward: returns (feature, x) == (pooled, pooled)."""
    x = jnp.transpose(x_nchw, (0, 2, 3, 1)).astype(jnp.bfloat16)   # NCHW->NHWC
    x = conv_bn(x, params['conv1_w'], params['conv1_b'],
                stride=2, pad=3, relu=True)                        # conv1+bn1+relu
    x = maxpool_3x3_s2(x)                                          # maxpool
    for layer in params['layers']:                                 # layer1..4
        for blk in layer:
            x = bottleneck(x, blk)
    feat = avgpool_global(x)                                       # avgpool+view
    return feat, feat                                              # (feature, x)


# ---------------------------------------------------------------------------
# main
# ---------------------------------------------------------------------------

if __name__ == "__main__":
    # Sanity check 1: fused bias + residual + ReLU epilogue, multi-tile M/N.
    ka, kb, kr = jax.random.split(jax.random.PRNGKey(7), 3)
    ta = jax.random.normal(ka, (512, 384), jnp.float32).astype(jnp.bfloat16)
    tb = jax.random.normal(kb, (384, 256), jnp.float32).astype(jnp.bfloat16)
    tr = jax.random.normal(kr, (512, 256), jnp.float32).astype(jnp.bfloat16)
    tbias = jnp.linspace(-2.0, 2.0, 256, dtype=jnp.float32)
    got = matmul_bias_act(ta, tb, tbias, residual=tr, relu=True)
    want = jnp.maximum(
        jnp.dot(ta.astype(jnp.float32), tb.astype(jnp.float32),
                precision=jax.lax.Precision.HIGHEST)
        + tbias + tr.astype(jnp.float32), 0.0)
    assert jnp.allclose(got.astype(jnp.float32), want, atol=0.35, rtol=2e-2), \
        "fused matmul mismatch"

    # Sanity check 2: K > 2048 split across the 'arbitrary' reduction axis.
    kc, kd = jax.random.split(jax.random.PRNGKey(11))
    tc2 = jax.random.normal(kc, (64, 2560), jnp.float32).astype(jnp.bfloat16)
    td2 = jax.random.normal(kd, (2560, 128), jnp.float32).astype(jnp.bfloat16)
    got2 = matmul_bias_act(tc2, td2, jnp.zeros((128,), jnp.float32), relu=False)
    want2 = jnp.dot(tc2.astype(jnp.float32), td2.astype(jnp.float32),
                    precision=jax.lax.Precision.HIGHEST)
    assert jnp.allclose(got2.astype(jnp.float32), want2, atol=1.0, rtol=2e-2), \
        "K-split matmul mismatch"

    # Deterministic parameters and input (small shapes: batch=2, 3x64x64).
    params = make_resnet50_params(jax.random.PRNGKey(1))
    x = jax.random.normal(jax.random.PRNGKey(0), (2, 3, 64, 64), jnp.float32)

    feature, out = resnet50_forward(x, params)
    feature = jax.block_until_ready(feature)
    out = jax.block_until_ready(out)

    assert feature.shape == (2, 2048) and out.shape == (2, 2048)
    assert bool(jnp.all(jnp.isfinite(feature)))
    print("KERNEL_OK")
</pallas_src>

<mosaic_0001>
module attributes {stable_mosaic.version = 11 : i64} {
  func.func @_mm_kernel(%arg0: i32, %arg1: i32, %arg2: i32, %arg3: memref<256x384xbf16, #tpu.memory_space<vmem>>, %arg4: memref<384x256xbf16, #tpu.memory_space<vmem>>, %arg5: memref<1x256xf32, #tpu.memory_space<vmem>>, %arg6: memref<256x256xbf16, #tpu.memory_space<vmem>>, %arg7: memref<256x256xbf16, #tpu.memory_space<vmem>>, %arg8: memref<256x256xf32, #tpu.memory_space<vmem>>) attributes {dimension_semantics = [#tpu.dimension_semantics<parallel>, #tpu.dimension_semantics<parallel>, #tpu.dimension_semantics<arbitrary>], iteration_bounds = array<i64: 2, 1, 1>, scalar_prefetch = 0 : i64, scratch_operands = 1 : i64, tpu.core_type = #tpu.core_type<tc>, window_params = [{transform_indices = @transform_0, window_bounds = array<i64: 256, 384>}, {transform_indices = @transform_1, window_bounds = array<i64: 384, 256>}, {transform_indices = @transform_2, window_bounds = array<i64: 1, 256>}, {transform_indices = @transform_3, window_bounds = array<i64: 256, 256>}, {transform_indices = @transform_4, window_bounds = array<i64: 256, 256>}]} {
    %c0_i32 = arith.constant 0 : i32
    %0 = arith.cmpi eq, %arg2, %c0_i32 : i32
    %1 = arith.extui %0 : i1 to i32
    %c0_i32_0 = arith.constant 0 : i32
    %2 = arith.cmpi ne, %1, %c0_i32_0 : i32
    scf.if %2 {
      %cst_10 = arith.constant 0.000000e+00 : f32
      %12 = vector.broadcast %cst_10 : f32 to vector<256x256xf32>
      %c0_11 = arith.constant 0 : index
      %c0_12 = arith.constant 0 : index
      %13 = vector.load %arg8[%c0_11, %c0_12] : memref<256x256xf32, #tpu.memory_space<vmem>>, vector<256x256xf32>
      tpu.vector_store %arg8[%c0_11, %c0_12], %12 {strides = array<i32>} : memref<256x256xf32, #tpu.memory_space<vmem>>, vector<256x256xf32>,
    } else {
    }
    %c0 = arith.constant 0 : index
    %c0_1 = arith.constant 0 : index
    %3 = vector.load %arg8[%c0, %c0_1] : memref<256x256xf32, #tpu.memory_space<vmem>>, vector<256x256xf32>
    %c0_2 = arith.constant 0 : index
    %c0_3 = arith.constant 0 : index
    %4 = vector.load %arg3[%c0_2, %c0_3] : memref<256x384xbf16, #tpu.memory_space<vmem>>, vector<256x384xbf16>
    %c0_4 = arith.constant 0 : index
    %c0_5 = arith.constant 0 : index
    %5 = vector.load %arg4[%c0_4, %c0_5] : memref<384x256xbf16, #tpu.memory_space<vmem>>, vector<384x256xbf16>
    %cst = arith.constant dense<0.000000e+00> : vector<256x256xf32>
    %6 = tpu.matmul %4, %5, %cst {dimension_numbers = #tpu.dot_dimension_numbers<[1], [0], [0], [1], [0, 0, 1, 1], [], []>} : vector<256x384xbf16>, vector<384x256xbf16>, vector<256x256xf32> -> vector<256x256xf32>
    %7 = arith.addf %3, %6 : vector<256x256xf32>
    %c0_6 = arith.constant 0 : index
    %c0_7 = arith.constant 0 : index
    %8 = vector.load %arg8[%c0_6, %c0_7] : memref<256x256xf32, #tpu.memory_space<vmem>>, vector<256x256xf32>
    tpu.vector_store %arg8[%c0_6, %c0_7], %7 {strides = array<i32>} : memref<256x256xf32, #tpu.memory_space<vmem>>, vector<256x256xf32>,
    %c0_i32_8 = arith.constant 0 : i32
    %9 = arith.cmpi eq, %arg2, %c0_i32_8 : i32
    %10 = arith.extui %9 : i1 to i32
    %c0_i32_9 = arith.constant 0 : i32
    %11 = arith.cmpi ne, %10, %c0_i32_9 : i32
    scf.if %11 {
      %c0_10 = arith.constant 0 : index
      %c0_11 = arith.constant 0 : index
      %12 = vector.load %arg8[%c0_10, %c0_11] : memref<256x256xf32, #tpu.memory_space<vmem>>, vector<256x256xf32>
      %c0_12 = arith.constant 0 : index
      %c0_13 = arith.constant 0 : index
      %13 = vector.load %arg5[%c0_12, %c0_13] : memref<1x256xf32, #tpu.memory_space<vmem>>, vector<1x256xf32>
      %14 = vector.broadcast %13 : vector<1x256xf32> to vector<256x256xf32>
      %15 = arith.addf %12, %14 : vector<256x256xf32>
      %c0_14 = arith.constant 0 : index
      %c0_15 = arith.constant 0 : index
      %16 = vector.load %arg6[%c0_14, %c0_15] : memref<256x256xbf16, #tpu.memory_space<vmem>>, vector<256x256xbf16>
      %17 = arith.extf %16 : vector<256x256xbf16> to vector<256x256xf32>
      %18 = arith.addf %15, %17 : vector<256x256xf32>
      %cst_16 = arith.constant 0.000000e+00 : f32
      %19 = vector.broadcast %cst_16 : f32 to vector<256x256xf32>
      %20 = arith.maximumf %18, %19 : vector<256x256xf32>
      %21 = arith.truncf %20 : vector<256x256xf32> to vector<256x256xbf16>
      %c0_17 = arith.constant 0 : index
      %c0_18 = arith.constant 0 : index
      %22 = vector.load %arg7[%c0_17, %c0_18] : memref<256x256xbf16, #tpu.memory_space<vmem>>, vector<256x256xbf16>
      tpu.vector_store %arg7[%c0_17, %c0_18], %21 {strides = array<i32>} : memref<256x256xbf16, #tpu.memory_space<vmem>>, vector<256x256xbf16>,
    } else {
    }
    return
  }
  func.func @transform_0(%arg0: i32, %arg1: i32, %arg2: i32) -> (i32, i32) {
    %c0_i32 = arith.constant 0 : i32
    return %arg0, %arg2 : i32, i32
  }
  func.func @transform_1(%arg0: i32, %arg1: i32, %arg2: i32) -> (i32, i32) {
    %c0_i32 = arith.constant 0 : i32
    return %arg2, %arg1 : i32, i32
  }
  func.func @transform_2(%arg0: i32, %arg1: i32, %arg2: i32) -> (i32, i32) {
    %c0_i32 = arith.constant 0 : i32
    %c0_i32_0 = arith.constant 0 : i32
    return %c0_i32, %arg1 : i32, i32
  }
  func.func @transform_3(%arg0: i32, %arg1: i32, %arg2: i32) -> (i32, i32) {
    %c0_i32 = arith.constant 0 : i32
    return %arg0, %arg1 : i32, i32
  }
  func.func @transform_4(%arg0: i32, %arg1: i32, %arg2: i32) -> (i32, i32) {
    %c0_i32 = arith.constant 0 : i32
    return %arg0, %arg1 : i32, i32
  }
}

</mosaic_0001>

<llo_original>
// kernel: tpu_custom_call.1
$region0: #{tpu_custom_call.1}
  #allocation0 [shape = 'u32[]', space=smem, size = 0x4, offset = 0x4, fixed_abs, tag = 'smem constant byte address 0x4 - core index']
  #allocation1 [shape = 'u32[144,128]{1,0:T(1,128)}', space=vmem, size = 0x12000, scoped, tag = 'internal scratch']
  #allocation2 [shape = 'f32[256,256]{1,0:T(8,128)}', space=vmem, size = 0x40000, scoped, tag = 'scratch operand']
  %s0 = inlined_call_operand.hbm [shape: bf16[512,384], index: 0, kind: input, shape index: {}]
  %s1 = inlined_call_operand.hbm [shape: bf16[384,256], index: 1, kind: input, shape index: {}]
  %s2 = inlined_call_operand.vmem [shape: f32[1,256], index: 2, kind: input, shape index: {}]
  %s3 = inlined_call_operand.hbm [shape: bf16[512,256], index: 3, kind: input, shape index: {}]
  %s4 = inlined_call_operand.hbm [shape: bf16[512,256], index: 4, kind: output, shape index: {}]
  %s5 = sld [smem:[#allocation0]]
  $region69: #{tpu_custom_call.1} parent=0
    _
  %s7 = ssub.s32 1, %s5
  %s8 = scalar_select 0, %s7, %s5
  $region1: #{tpu_custom_call.1} parent=0
    #allocation3 [shape = 'u8[393216]{0}', space=vmem, size = 0x60000, scoped, tag = 'input window, operand 0']
    #allocation4 [shape = 's32[2]{0}', space=sflag, size = 0x8, scoped, tag = 'scoped memory for tpu_custom_call.1']
    #allocation5 [shape = 's32[2]{0}', space=sflag, size = 0x8, scoped, tag = 'scoped memory for tpu_custom_call.1']
    #allocation6 [shape = 'u8[196608]{0}', space=vmem, size = 0x30000, scoped, tag = 'input window, operand 1, single buffered']
    #allocation7 [shape = 's32[1]{0}', space=sflag, size = 0x4, scoped, tag = 'scoped memory for tpu_custom_call.1']
    #allocation8 [shape = 'u8[262144]{0}', space=vmem, size = 0x40000, scoped, tag = 'input window, operand 3']
    #allocation9 [shape = 'u8[262144]{0}', space=vmem, size = 0x40000, scoped, tag = 'output window, operand 0']
    %9 = vsyncpa [#allocation4], 0
    %s10 = scalar_lea.sflag [#allocation4], 1
    %11 = vsyncpa %s10, 0
    %12 = vsyncpa [#allocation7], 0
    %13 = vsyncpa [#allocation5], 0
    %s14 = scalar_lea.sflag [#allocation5], 1
    %15 = vsyncpa %s14, 0
    loop: start=0, step=1, limit=4
    $region2: #{tpu_custom_call.1} parent=1 // loop_pre_header
      _
    $region3: #{tpu_custom_call.1} parent=1 // loop_header
      %s17 = sphi 0, %s21
      %p18 = scmp.ge.s32.totalorder %s17, 4
      %s24 = sphi 0, %s43
      %s25 = sphi 0, %s39
      %s26 = sphi 0, %s35
      %s27 = sphi 0, %s24
      %s28 = sphi 0, %s25
      %s29 = sphi 0, %s26
      %s30 = sphi 0, %s27
      %s31 = sphi 0, %s28
      %s32 = sphi 0, %s29
      %s48 = sphi 0, %s50
      %s51 = sphi 0, %s48
      %s52 = sphi 0, %s51
      %s68 = sphi 0, %s52
      %s76 = sphi 0, %s78
      %s79 = sphi 0, %s76
      %s80 = sphi 0, %s79
      %s96 = sphi 0, %s80
      %s102 = sphi 0, %s104
      %s105 = sphi 0, %s102
      %s106 = sphi 0, %s105
      %s122 = sphi 0, %s106
      %s130 = sphi 0, %s132
      %s133 = sphi 0, %s130
      %s134 = sphi 0, %s133
      %s150 = sphi 0, %s134
      %s158 = sphi 0, %s160
      %s161 = sphi 0, %s158
      %s162 = sphi 0, %s161
      %s178 = sphi 0, %s162
    $region4: #{tpu_custom_call.1} parent=1 // loop_header_branch
      %20 = sbr.rel (%p18) target = $region8
    $region5: #{tpu_custom_call.1} parent=1 // loop_body
      %s22 = ssub.s32 %s17, 1
      %s23 = ssub.s32 %s17, 2
      %s33 = sadd.s32 1, %s26
      %p34 = scmp.ge.s32.totalorder %s33, 1
      %s35 = scalar_select %p34, 0, %s33
      %s36 = sadd.s32 1, %s25
      %s37 = scalar_select %p34, %s36, %s25
      %p38 = scmp.ge.s32.totalorder %s37, 1
      %s39 = scalar_select %p38, 0, %s37
      %s40 = sadd.s32 1, %s24
      %s41 = scalar_select %p38, %s40, %s24
      %p42 = scmp.ge.s32.totalorder %s41, 2
      %s43 = scalar_select %p42, 0, %s41
      %s44 = ssub.s32 %s24, %s43
      %s45 = ssub.s32 %s26, %s35
      %s46 = sor.u32 %s44, %s45
      %p47 = scmp.eq.s32.totalorder %s46, 0
      %s49 = sadd.s32 %s48, 1
      %s50 = scalar_select %p47, %s48, %s49
      %p53 = pneg %p47
      %p54 = scmp.eq.s32.totalorder %s17, 1
      %p55 = por %p53, %p54
      %p56 = scmp.ne.s32.totalorder %s48, %s51
      %p57 = scmp.eq.s32.totalorder %s17, 0
      %p58 = por %p56, %p57
      %p59 = scmp.ne.s32.totalorder %s48, %s51
      %p60 = scmp.eq.s32.totalorder %s22, 1
      %p61 = por %p59, %p60
      %p62 = scmp.ne.s32.totalorder %s51, %s52
      %p63 = scmp.eq.s32.totalorder %s22, 0
      %p64 = por %p62, %p63
      %p65 = scmp.ne.s32.totalorder %s51, %s52
      %p66 = scmp.eq.s32.totalorder %s23, 1
      %p67 = por %p65, %p66
      %p69 = scmp.ne.s32.totalorder %s52, %s68
      %p70 = scmp.eq.s32.totalorder %s23, 0
      %p71 = por %p69, %p70
      %s72 = ssub.s32 %s26, %s35
      %s73 = ssub.s32 %s25, %s39
      %s74 = sor.u32 %s72, %s73
      %p75 = scmp.eq.s32.totalorder %s74, 0
      %s77 = sadd.s32 %s76, 1
      %s78 = scalar_select %p75, %s76, %s77
      %p81 = pneg %p75
      %p82 = scmp.eq.s32.totalorder %s17, 1
      %p83 = por %p81, %p82
      %p84 = scmp.ne.s32.totalorder %s76, %s79
      %p85 = scmp.eq.s32.totalorder %s17, 0
      %p86 = por %p84, %p85
      %p87 = scmp.ne.s32.totalorder %s76, %s79
      %p88 = scmp.eq.s32.totalorder %s22, 1
      %p89 = por %p87, %p88
      %p90 = scmp.ne.s32.totalorder %s79, %s80
      %p91 = scmp.eq.s32.totalorder %s22, 0
      %p92 = por %p90, %p91
      %p93 = scmp.ne.s32.totalorder %s79, %s80
      %p94 = scmp.eq.s32.totalorder %s23, 1
      %p95 = por %p93, %p94
      %p97 = scmp.ne.s32.totalorder %s80, %s96
      %p98 = scmp.eq.s32.totalorder %s23, 0
      %p99 = por %p97, %p98
      %s100 = ssub.s32 %s25, %s39
      %p101 = scmp.eq.s32.totalorder %s100, 0
      %s103 = sadd.s32 %s102, 1
      %s104 = scalar_select %p101, %s102, %s103
      %p107 = pneg %p101
      %p108 = scmp.eq.s32.totalorder %s17, 1
      %p109 = por %p107, %p108
      %p110 = scmp.ne.s32.totalorder %s102, %s105
      %p111 = scmp.eq.s32.totalorder %s17, 0
      %p112 = por %p110, %p111
      %p113 = scmp.ne.s32.totalorder %s102, %s105
      %p114 = scmp.eq.s32.totalorder %s22, 1
      %p115 = por %p113, %p114
      %p116 = scmp.ne.s32.totalorder %s105, %s106
      %p117 = scmp.eq.s32.totalorder %s22, 0
      %p118 = por %p116, %p117
      %p119 = scmp.ne.s32.totalorder %s105, %s106
      %p120 = scmp.eq.s32.totalorder %s23, 1
      %p121 = por %p119, %p120
      %p123 = scmp.ne.s32.totalorder %s106, %s122
      %p124 = scmp.eq.s32.totalorder %s23, 0
      %p125 = por %p123, %p124
      %s126 = ssub.s32 %s24, %s43
      %s127 = ssub.s32 %s25, %s39
      %s128 = sor.u32 %s126, %s127
      %p129 = scmp.eq.s32.totalorder %s128, 0
      %s131 = sadd.s32 %s130, 1
      %s132 = scalar_select %p129, %s130, %s131
      %p135 = pneg %p129
      %p136 = scmp.eq.s32.totalorder %s17, 1
      %p137 = por %p135, %p136
      %p138 = scmp.ne.s32.totalorder %s130, %s133
      %p139 = scmp.eq.s32.totalorder %s17, 0
      %p140 = por %p138, %p139
      %p141 = scmp.ne.s32.totalorder %s130, %s133
      %p142 = scmp.eq.s32.totalorder %s22, 1
      %p143 = por %p141, %p142
      %p144 = scmp.ne.s32.totalorder %s133, %s134
      %p145 = scmp.eq.s32.totalorder %s22, 0
      %p146 = por %p144, %p145
      %p147 = scmp.ne.s32.totalorder %s133, %s134
      %p148 = scmp.eq.s32.totalorder %s23, 1
      %p149 = por %p147, %p148
      %p151 = scmp.ne.s32.totalorder %s134, %s150
      %p152 = scmp.eq.s32.totalorder %s23, 0
      %p153 = por %p151, %p152
      %s154 = ssub.s32 %s24, %s43
      %s155 = ssub.s32 %s25, %s39
      %s156 = sor.u32 %s154, %s155
      %p157 = scmp.eq.s32.totalorder %s156, 0
      %s159 = sadd.s32 %s158, 1
      %s160 = scalar_select %p157, %s158, %s159
      %p163 = pneg %p157
      %p164 = scmp.eq.s32.totalorder %s17, 1
      %p165 = por %p163, %p164
      %p166 = scmp.ne.s32.totalorder %s158, %s161
      %p167 = scmp.eq.s32.totalorder %s17, 0
      %p168 = por %p166, %p167
      %p169 = scmp.ne.s32.totalorder %s158, %s161
      %p170 = scmp.eq.s32.totalorder %s22, 1
      %p171 = por %p169, %p170
      %p172 = scmp.ne.s32.totalorder %s161, %s162
      %p173 = scmp.eq.s32.totalorder %s22, 0
      %p174 = por %p172, %p173
      %p175 = scmp.ne.s32.totalorder %s161, %s162
      %p176 = scmp.eq.s32.totalorder %s23, 1
      %p177 = por %p175, %p176
      %p179 = scmp.ne.s32.totalorder %s162, %s178
      %p180 = scmp.eq.s32.totalorder %s23, 0
      %p181 = por %p179, %p180
      %p182 = scmp.le.s32.totalorder 1, %s17
      %p183 = scmp.lt.s32.totalorder %s17, 3
      %p184 = pnand %p182, %p183
      %p185 = pneg %p184
      // Predicated region
      $region9: #{tpu_custom_call.1} parent=5 // pred_check
        _
      $region10: #{tpu_custom_call.1} parent=5 // pred_check_branch
        %187 = sbr.rel (%p184) target = $region12
      $region11: #{tpu_custom_call.1} parent=5 // pred_region
        %s188 = ssub.s32 %s17, 1
        // Predicated region
        $region13: #{tpu_custom_call.1} parent=11 // pred_check
          %p189 = pneg %p92
        $region14: #{tpu_custom_call.1} parent=11 // pred_check_branch
          %191 = sbr.rel (%p189) target = $region16
        $region15: #{tpu_custom_call.1} parent=11 // pred_region
          %s192 = smul.u32 48, %s29
          %s193 = smul.u32 2, %s28
          %s195 = ssub.s32 6144, 6144
          %196 = vsyncadd [#allocation7], %s195
          %s197 = smul.addr %s192, 2
          %s198 = sadd.s32 %s193, %s197
          %s199 = smul.addr %s198, 64
          %s200 = scalar_lea.hbm %s1, %s199
          %s201 = sshll.u32 [#allocation6], 4
          %s202 = int_to_ptr.vmem [resolvable:$true] %s201
          %207 = dma.hbm_to_vmem [thread:$0]  %s200, 6144, %s202, [#allocation7], 128, 128, 8
        $region16: #{tpu_custom_call.1} parent=11 // pred_fallthru
          _
        // Predicated region
        $region17: #{tpu_custom_call.1} parent=11 // pred_check
          %p208 = pneg %p118
        $region18: #{tpu_custom_call.1} parent=11 // pred_check_branch
          %210 = sbr.rel (%p208) target = $region20
        $region19: #{tpu_custom_call.1} parent=11 // pred_region
          %s211 = smul.u32 2, %s28
          %p212 = scmp.lt.s32.totalorder %s211, 1
          %s213 = scalar_select %p212, %s211, 1
          %s214 = scalar_lea.vmem %s2, %s213
          %s215 = smul.u32 2, %s28
        $region20: #{tpu_custom_call.1} parent=11 // pred_fallthru
          _
      $region12: #{tpu_custom_call.1} parent=5 // pred_fallthru
        _
      %p216 = scmp.lt.s32.totalorder %s17, 2
      // Predicated region
      $region21: #{tpu_custom_call.1} parent=5 // pred_check
        %p217 = pneg %p216
      $region22: #{tpu_custom_call.1} parent=5 // pred_check_branch
        %219 = sbr.rel (%p217) target = $region24
      $region23: #{tpu_custom_call.1} parent=5 // pred_region
        // Predicated region
        $region25: #{tpu_custom_call.1} parent=23 // pred_check
          %p220 = pneg %p58
        $region26: #{tpu_custom_call.1} parent=23 // pred_check_branch
          %222 = sbr.rel (%p220) target = $region28
        $region27: #{tpu_custom_call.1} parent=23 // pred_region
          %s223 = sand.u32 %s17, 1
          %s224 = scalar_lea.sflag [#allocation4], %s223
          %s225 = sand.u32 %s48, 1
          %s226 = smul.addr %s225, 384
          %s227 = scalar_lea.vmem [#allocation3], %s226
          %s228 = smul.u32 32, %s24
          %s229 = smul.u32 3, %s26
          %s231 = ssub.s32 6144, 6144
          %232 = vsyncadd %s224, %s231
          %s233 = smul.addr %s228, 3
          %s234 = sadd.s32 %s229, %s233
          %s235 = smul.addr %s234, 64
          %s236 = scalar_lea.hbm %s0, %s235
          %s237 = sshll.u32 %s227, 4
          %s238 = int_to_ptr.vmem [resolvable:$true] %s237
          %243 = dma.hbm_to_vmem [thread:$0]  %s236, 6144, %s238, %s224, 192, 192, 12
        $region28: #{tpu_custom_call.1} parent=23 // pred_fallthru
          _
        // Predicated region
        $region29: #{tpu_custom_call.1} parent=23 // pred_check
          %p244 = pneg %p140
        $region30: #{tpu_custom_call.1} parent=23 // pred_check_branch
          %246 = sbr.rel (%p244) target = $region32
        $region31: #{tpu_custom_call.1} parent=23 // pred_region
          %s247 = sand.u32 %s17, 1
          %s248 = scalar_lea.sflag [#allocation4], %s247
          %s249 = sand.u32 %s130, 1
          %s250 = smul.addr %s249, 256
          %s251 = scalar_lea.vmem [#allocation8], %s250
          %s252 = smul.u32 32, %s24
          %s253 = smul.u32 2, %s25
          %s255 = ssub.s32 4096, 4096
          %256 = vsyncadd %s248, %s255
          %s257 = smul.addr %s252, 2
          %s258 = sadd.s32 %s253, %s257
          %s259 = smul.addr %s258, 64
          %s260 = scalar_lea.hbm %s3, %s259
          %s261 = sshll.u32 %s251, 4
          %s262 = int_to_ptr.vmem [resolvable:$true] %s261
          %267 = dma.hbm_to_vmem [thread:$0]  %s260, 4096, %s262, %s248, 128, 128, 8
        $region32: #{tpu_custom_call.1} parent=23 // pred_fallthru
          _
      $region24: #{tpu_custom_call.1} parent=5 // pred_fallthru
        _
      %p268 = scmp.le.s32.totalorder 1, %s17
      %p269 = scmp.lt.s32.totalorder %s17, 3
      %p270 = pnand %p268, %p269
      %p271 = pneg %p270
      // Predicated region
      $region33: #{tpu_custom_call.1} parent=5 // pred_check
        _
      $region34: #{tpu_custom_call.1} parent=5 // pred_check_branch
        %273 = sbr.rel (%p270) target = $region36
      $region35: #{tpu_custom_call.1} parent=5 // pred_region
        %s274 = ssub.s32 %s17, 1
        %s275 = sand.u32 %s22, 1
        %s276 = scalar_lea.sflag [#allocation4], %s275
        %s277 = sand.u32 %s51, 1
        %s278 = smul.addr %s277, 384
        %s279 = scalar_lea.vmem [#allocation3], %s278
        // Predicated region
        $region37: #{tpu_custom_call.1} parent=35 // pred_check
          %p280 = pneg %p64
        $region38: #{tpu_custom_call.1} parent=35 // pred_check_branch
          %282 = sbr.rel (%p280) target = $region40
        $region39: #{tpu_custom_call.1} parent=35 // pred_region
          %283 = dma.done %s276, 6144
        $region40: #{tpu_custom_call.1} parent=35 // pred_fallthru
          _
        // Predicated region
        $region41: #{tpu_custom_call.1} parent=35 // pred_check
          %p284 = pneg %p92
        $region42: #{tpu_custom_call.1} parent=35 // pred_check_branch
          %286 = sbr.rel (%p284) target = $region44
        $region43: #{tpu_custom_call.1} parent=35 // pred_region
          %287 = dma.done [#allocation7], 6144
        $region44: #{tpu_custom_call.1} parent=35 // pred_fallthru
          _
        %s288 = sand.u32 %s22, 1
        %s289 = scalar_lea.sflag [#allocation4], %s288
        %s290 = sand.u32 %s133, 1
        %s291 = smul.addr %s290, 256
        %s292 = scalar_lea.vmem [#allocation8], %s291
        // Predicated region
        $region45: #{tpu_custom_call.1} parent=35 // pred_check
          %p293 = pneg %p146
        $region46: #{tpu_custom_call.1} parent=35 // pred_check_branch
          %295 = sbr.rel (%p293) target = $region48
        $region47: #{tpu_custom_call.1} parent=35 // pred_region
          %296 = dma.done %s289, 4096
        $region48: #{tpu_custom_call.1} parent=35 // pred_fallthru
          _
        %s297 = sand.u32 %s22, 1
        %s298 = scalar_lea.sflag [#allocation4], %s297
        %s299 = sand.u32 %s51, 1
        %s300 = smul.addr %s299, 384
        %s301 = scalar_lea.vmem [#allocation3], %s300
        %p302 = pneg %p64
        %p303 = pneg %p61
        %p304 = pneg %p92
        %p305 = pneg %p89
        %s306 = smul.u32 2, %s28
        %p307 = scmp.lt.s32.totalorder %s306, 1
        %s308 = scalar_select %p307, %s306, 1
        %s309 = scalar_lea.vmem %s2, %s308
        %p310 = pneg %p118
        %p311 = pneg %p115
        %s312 = sand.u32 %s22, 1
        %s313 = scalar_lea.sflag [#allocation4], %s312
        %s314 = sand.u32 %s133, 1
        %s315 = smul.addr %s314, 256
        %s316 = scalar_lea.vmem [#allocation8], %s315
        %p317 = pneg %p146
        %p318 = pneg %p143
        %p319 = pneg %p174
        %p320 = pneg %p171
        %s321 = sand.u32 %s161, 1
        %s322 = scalar_lea.sflag [#allocation5], %s321
        %s323 = sand.u32 %s161, 1
        %s324 = smul.addr %s323, 256
        %s325 = scalar_lea.vmem [#allocation9], %s324
        %s326 = smul.u32 32, %s27
        %s327 = smul.u32 3, %s29
        %s328 = smul.u32 48, %s29
        %s329 = smul.u32 2, %s28
        %s330 = smul.u32 2, %s28
        %p331 = scmp.lt.s32.totalorder %s330, 1
        %s332 = scalar_select %p331, %s330, 1
        %s333 = scalar_lea.vmem %s2, %s332
        %s334 = smul.u32 2, %s28
        %s335 = smul.u32 32, %s27
        %s336 = smul.u32 2, %s28
        %s337 = smul.u32 32, %s27
        %s338 = smul.u32 2, %s28
        %p340 = scmp.eq.s32.totalorder %s29, 0
        // Predicated region
        $region49: #{tpu_custom_call.1} parent=35 // pred_check
          %p341 = pneg %p340
        $region50: #{tpu_custom_call.1} parent=35 // pred_check_branch
          %343 = sbr.rel (%p341) target = $region52
        $region51: #{tpu_custom_call.1} parent=35 // pred_region
          %344 = vst [vmem:[#allocation2] sm:$0xff] 0.0
          %345 = vst [vmem:[#allocation2 + $0x8] sm:$0xff] 0.0
          %346 = vst [vmem:[#allocation2 + $0x10] sm:$0xff] 0.0
          %347 = vst [vmem:[#allocation2 + $0x18] sm:$0xff] 0.0
          %348 = vst [vmem:[#allocation2 + $0x20] sm:$0xff] 0.0
          %349 = vst [vmem:[#allocation2 + $0x28] sm:$0xff] 0.0
          %350 = vst [vmem:[#allocation2 + $0x30] sm:$0xff] 0.0
          %351 = vst [vmem:[#allocation2 + $0x38] sm:$0xff] 0.0
          %352 = vst [vmem:[#allocation2 + $0x40] sm:$0xff] 0.0
          %353 = vst [vmem:[#allocation2 + $0x48] sm:$0xff] 0.0
          %354 = vst [vmem:[#allocation2 + $0x50] sm:$0xff] 0.0
          %355 = vst [vmem:[#allocation2 + $0x58] sm:$0xff] 0.0
          %356 = vst [vmem:[#allocation2 + $0x60] sm:$0xff] 0.0
          %357 = vst [vmem:[#allocation2 + $0x68] sm:$0xff] 0.0
          %358 = vst [vmem:[#allocation2 + $0x70] sm:$0xff] 0.0
          %359 = vst [vmem:[#allocation2 + $0x78] sm:$0xff] 0.0
          %360 = vst [vmem:[#allocation2 + $0x80] sm:$0xff] 0.0
          %361 = vst [vmem:[#allocation2 + $0x88] sm:$0xff] 0.0
          %362 = vst [vmem:[#allocation2 + $0x90] sm:$0xff] 0.0
          %363 = vst [vmem:[#allocation2 + $0x98] sm:$0xff] 0.0
          %364 = vst [vmem:[#allocation2 + $0xa0] sm:$0xff] 0.0
          %365 = vst [vmem:[#allocation2 + $0xa8] sm:$0xff] 0.0
          %366 = vst [vmem:[#allocation2 + $0xb0] sm:$0xff] 0.0
          %367 = vst [vmem:[#allocation2 + $0xb8] sm:$0xff] 0.0
          %368 = vst [vmem:[#allocation2 + $0xc0] sm:$0xff] 0.0
          %369 = vst [vmem:[#allocation2 + $0xc8] sm:$0xff] 0.0
          %370 = vst [vmem:[#allocation2 + $0xd0] sm:$0xff] 0.0
          %371 = vst [vmem:[#allocation2 + $0xd8] sm:$0xff] 0.0
          %372 = vst [vmem:[#allocation2 + $0xe0] sm:$0xff] 0.0
          %373 = vst [vmem:[#allocation2 + $0xe8] sm:$0xff] 0.0
          %374 = vst [vmem:[#allocation2 + $0xf0] sm:$0xff] 0.0
          %375 = vst [vmem:[#allocation2 + $0xf8] sm:$0xff] 0.0
          %376 = vst [vmem:[#allocation2 + $0x100] sm:$0xff] 0.0
          %377 = vst [vmem:[#allocation2 + $0x108] sm:$0xff] 0.0
          %378 = vst [vmem:[#allocation2 + $0x110] sm:$0xff] 0.0
          %379 = vst [vmem:[#allocation2 + $0x118] sm:$0xff] 0.0
          %380 = vst [vmem:[#allocation2 + $0x120] sm:$0xff] 0.0
          %381 = vst [vmem:[#allocation2 + $0x128] sm:$0xff] 0.0
          %382 = vst [vmem:[#allocation2 + $0x130] sm:$0xff] 0.0
          %383 = vst [vmem:[#allocation2 + $0x138] sm:$0xff] 0.0
          %384 = vst [vmem:[#allocation2 + $0x140] sm:$0xff] 0.0
          %385 = vst [vmem:[#allocation2 + $0x148] sm:$0xff] 0.0
          %386 = vst [vmem:[#allocation2 + $0x150] sm:$0xff] 0.0
          %387 = vst [vmem:[#allocation2 + $0x158] sm:$0xff] 0.0
          %388 = vst [vmem:[#allocation2 + $0x160] sm:$0xff] 0.0
          %389 = vst [vmem:[#allocation2 + $0x168] sm:$0xff] 0.0
          %390 = vst [vmem:[#allocation2 + $0x170] sm:$0xff] 0.0
          %391 = vst [vmem:[#allocation2 + $0x178] sm:$0xff] 0.0
          %392 = vst [vmem:[#allocation2 + $0x180] sm:$0xff] 0.0
          %393 = vst [vmem:[#allocation2 + $0x188] sm:$0xff] 0.0
          %394 = vst [vmem:[#allocation2 + $0x190] sm:$0xff] 0.0
          %395 = vst [vmem:[#allocation2 + $0x198] sm:$0xff] 0.0
          %396 = vst [vmem:[#allocation2 + $0x1a0] sm:$0xff] 0.0
          %397 = vst [vmem:[#allocation2 + $0x1a8] sm:$0xff] 0.0
          %398 = vst [vmem:[#allocation2 + $0x1b0] sm:$0xff] 0.0
          %399 = vst [vmem:[#allocation2 + $0x1b8] sm:$0xff] 0.0
          %400 = vst [vmem:[#allocation2 + $0x1c0] sm:$0xff] 0.0
          %401 = vst [vmem:[#allocation2 + $0x1c8] sm:$0xff] 0.0
          %402 = vst [vmem:[#allocation2 + $0x1d0] sm:$0xff] 0.0
          %403 = vst [vmem:[#allocation2 + $0x1d8] sm:$0xff] 0.0
          %404 = vst [vmem:[#allocation2 + $0x1e0] sm:$0xff] 0.0
          %405 = vst [vmem:[#allocation2 + $0x1e8] sm:$0xff] 0.0
          %406 = vst [vmem:[#allocation2 + $0x1f0] sm:$0xff] 0.0
          %407 = vst [vmem:[#allocation2 + $0x1f8] sm:$0xff] 0.0
        $region52: #{tpu_custom_call.1} parent=35 // pred_fallthru
          _
        %v408 = vld [vmem:[#allocation2] sm:$0xff]
        %v409 = vld [vmem:[#allocation2 + $0x8] sm:$0xff]
        %v410 = vld [vmem:[#allocation2 + $0x10] sm:$0xff]
        %v411 = vld [vmem:[#allocation2 + $0x18] sm:$0xff]
        %v412 = vld [vmem:[#allocation2 + $0x20] sm:$0xff]
        %v413 = vld [vmem:[#allocation2 + $0x28] sm:$0xff]
        %v414 = vld [vmem:[#allocation2 + $0x30] sm:$0xff]
        %v415 = vld [vmem:[#allocation2 + $0x38] sm:$0xff]
        %v416 = vld [vmem:[#allocation2 + $0x40] sm:$0xff]
        %v417 = vld [vmem:[#allocation2 + $0x48] sm:$0xff]
        %v418 = vld [vmem:[#allocation2 + $0x50] sm:$0xff]
        %v419 = vld [vmem:[#allocation2 + $0x58] sm:$0xff]
        %v420 = vld [vmem:[#allocation2 + $0x60] sm:$0xff]
        %v421 = vld [vmem:[#allocation2 + $0x68] sm:$0xff]
        %v422 = vld [vmem:[#allocation2 + $0x70] sm:$0xff]
        %v423 = vld [vmem:[#allocation2 + $0x78] sm:$0xff]
        %v424 = vld [vmem:[#allocation2 + $0x80] sm:$0xff]
        %v425 = vld [vmem:[#allocation2 + $0x88] sm:$0xff]
        %v426 = vld [vmem:[#allocation2 + $0x90] sm:$0xff]
        %v427 = vld [vmem:[#allocation2 + $0x98] sm:$0xff]
        %v428 = vld [vmem:[#allocation2 + $0xa0] sm:$0xff]
        %v429 = vld [vmem:[#allocation2 + $0xa8] sm:$0xff]
        %v430 = vld [vmem:[#allocation2 + $0xb0] sm:$0xff]
        %v431 = vld [vmem:[#allocation2 + $0xb8] sm:$0xff]
        %v432 = vld [vmem:[#allocation2 + $0xc0] sm:$0xff]
        %v433 = vld [vmem:[#allocation2 + $0xc8] sm:$0xff]
        %v434 = vld [vmem:[#allocation2 + $0xd0] sm:$0xff]
        %v435 = vld [vmem:[#allocation2 + $0xd8] sm:$0xff]
        %v436 = vld [vmem:[#allocation2 + $0xe0] sm:$0xff]
        %v437 = vld [vmem:[#allocation2 + $0xe8] sm:$0xff]
        %v438 = vld [vmem:[#allocation2 + $0xf0] sm:$0xff]
        %v439 = vld [vmem:[#allocation2 + $0xf8] sm:$0xff]
        %v440 = vld [vmem:[#allocation2 + $0x100] sm:$0xff]
        %v441 = vld [vmem:[#allocation2 + $0x108] sm:$0xff]
        %v442 = vld [vmem:[#allocation2 + $0x110] sm:$0xff]
        %v443 = vld [vmem:[#allocation2 + $0x118] sm:$0xff]
        %v444 = vld [vmem:[#allocation2 + $0x120] sm:$0xff]
        %v445 = vld [vmem:[#allocation2 + $0x128] sm:$0xff]
        %v446 = vld [vmem:[#allocation2 + $0x130] sm:$0xff]
        %v447 = vld [vmem:[#allocation2 + $0x138] sm:$0xff]
        %v448 = vld [vmem:[#allocation2 + $0x140] sm:$0xff]
        %v449 = vld [vmem:[#allocation2 + $0x148] sm:$0xff]
        %v450 = vld [vmem:[#allocation2 + $0x150] sm:$0xff]
        %v451 = vld [vmem:[#allocation2 + $0x158] sm:$0xff]
        %v452 = vld [vmem:[#allocation2 + $0x160] sm:$0xff]
        %v453 = vld [vmem:[#allocation2 + $0x168] sm:$0xff]
        %v454 = vld [vmem:[#allocation2 + $0x170] sm:$0xff]
        %v455 = vld [vmem:[#allocation2 + $0x178] sm:$0xff]
        %v456 = vld [vmem:[#allocation2 + $0x180] sm:$0xff]
        %v457 = vld [vmem:[#allocation2 + $0x188] sm:$0xff]
        %v458 = vld [vmem:[#allocation2 + $0x190] sm:$0xff]
        %v459 = vld [vmem:[#allocation2 + $0x198] sm:$0xff]
        %v460 = vld [vmem:[#allocation2 + $0x1a0] sm:$0xff]
        %v461 = vld [vmem:[#allocation2 + $0x1a8] sm:$0xff]
        %v462 = vld [vmem:[#allocation2 + $0x1b0] sm:$0xff]
        %v463 = vld [vmem:[#allocation2 + $0x1b8] sm:$0xff]
        %v464 = vld [vmem:[#allocation2 + $0x1c0] sm:$0xff]
        %v465 = vld [vmem:[#allocation2 + $0x1c8] sm:$0xff]
        %v466 = vld [vmem:[#allocation2 + $0x1d0] sm:$0xff]
        %v467 = vld [vmem:[#allocation2 + $0x1d8] sm:$0xff]
        %v468 = vld [vmem:[#allocation2 + $0x1e0] sm:$0xff]
        %v469 = vld [vmem:[#allocation2 + $0x1e8] sm:$0xff]
        %v470 = vld [vmem:[#allocation2 + $0x1f0] sm:$0xff]
        %v471 = vld [vmem:[#allocation2 + $0x1f8] sm:$0xff]
        %v472 = vld [vmem:[%s279] sm:$0xff]
        %v473 = vld [vmem:[%s279 + $0x8] sm:$0xf]
        %v474 = vld [vmem:[%s279 + $0xc] sm:$0xff]
        %v475 = vld [vmem:[%s279 + $0x14] sm:$0xf]
        %v476 = vld [vmem:[%s279 + $0x18] sm:$0xff]
        %v477 = vld [vmem:[%s279 + $0x20] sm:$0xf]
        %v478 = vld [vmem:[%s279 + $0x24] sm:$0xff]
        %v479 = vld [vmem:[%s279 + $0x2c] sm:$0xf]
        %v480 = vld [vmem:[%s279 + $0x30] sm:$0xff]
        %v481 = vld [vmem:[%s279 + $0x38] sm:$0xf]
        %v482 = vld [vmem:[%s279 + $0x3c] sm:$0xff]
        %v483 = vld [vmem:[%s279 + $0x44] sm:$0xf]
        %v484 = vld [vmem:[%s279 + $0x48] sm:$0xff]
        %v485 = vld [vmem:[%s279 + $0x50] sm:$0xf]
        %v486 = vld [vmem:[%s279 + $0x54] sm:$0xff]
        %v487 = vld [vmem:[%s279 + $0x5c] sm:$0xf]
        %v488 = vld [vmem:[%s279 + $0x60] sm:$0xff]
        %v489 = vld [vmem:[%s279 + $0x68] sm:$0xf]
        %v490 = vld [vmem:[%s279 + $0x6c] sm:$0xff]
        %v491 = vld [vmem:[%s279 + $0x74] sm:$0xf]
        %v492 = vld [vmem:[%s279 + $0x78] sm:$0xff]
        %v493 = vld [vmem:[%s279 + $0x80] sm:$0xf]
        %v494 = vld [vmem:[%s279 + $0x84] sm:$0xff]
        %v495 = vld [vmem:[%s279 + $0x8c] sm:$0xf]
        %v496 = vld [vmem:[%s279 + $0x90] sm:$0xff]
        %v497 = vld [vmem:[%s279 + $0x98] sm:$0xf]
        %v498 = vld [vmem:[%s279 + $0x9c] sm:$0xff]
        %v499 = vld [vmem:[%s279 + $0xa4] sm:$0xf]
        %v500 = vld [vmem:[%s279 + $0xa8] sm:$0xff]
        %v501 = vld [vmem:[%s279 + $0xb0] sm:$0xf]
        %v502 = vld [vmem:[%s279 + $0xb4] sm:$0xff]
        %v503 = vld [vmem:[%s279 + $0xbc] sm:$0xf]
        %v504 = vld [vmem:[%s279 + $0xc0] sm:$0xff]
        %v505 = vld [vmem:[%s279 + $0xc8] sm:$0xf]
        %v506 = vld [vmem:[%s279 + $0xcc] sm:$0xff]
        %v507 = vld [vmem:[%s279 + $0xd4] sm:$0xf]
        %v508 = vld [vmem:[%s279 + $0xd8] sm:$0xff]
        %v509 = vld [vmem:[%s279 + $0xe0] sm:$0xf]
        %v510 = vld [vmem:[%s279 + $0xe4] sm:$0xff]
        %v511 = vld [vmem:[%s279 + $0xec] sm:$0xf]
        %v512 = vld [vmem:[%s279 + $0xf0] sm:$0xff]
        %v513 = vld [vmem:[%s279 + $0xf8] sm:$0xf]
        %v514 = vld [vmem:[%s279 + $0xfc] sm:$0xff]
        %v515 = vld [vmem:[%s279 + $0x104] sm:$0xf]
        %v516 = vld [vmem:[%s279 + $0x108] sm:$0xff]
        %v517 = vld [vmem:[%s279 + $0x110] sm:$0xf]
        %v518 = vld [vmem:[%s279 + $0x114] sm:$0xff]
        %v519 = vld [vmem:[%s279 + $0x11c] sm:$0xf]
        %v520 = vld [vmem:[%s279 + $0x120] sm:$0xff]
        %v521 = vld [vmem:[%s279 + $0x128] sm:$0xf]
        %v522 = vld [vmem:[%s279 + $0x12c] sm:$0xff]
        %v523 = vld [vmem:[%s279 + $0x134] sm:$0xf]
        %v524 = vld [vmem:[%s279 + $0x138] sm:$0xff]
        %v525 = vld [vmem:[%s279 + $0x140] sm:$0xf]
        %v526 = vld [vmem:[%s279 + $0x144] sm:$0xff]
        %v527 = vld [vmem:[%s279 + $0x14c] sm:$0xf]
        %v528 = vld [vmem:[%s279 + $0x150] sm:$0xff]
        %v529 = vld [vmem:[%s279 + $0x158] sm:$0xf]
        %v530 = vld [vmem:[%s279 + $0x15c] sm:$0xff]
        %v531 = vld [vmem:[%s279 + $0x164] sm:$0xf]
        %v532 = vld [vmem:[%s279 + $0x168] sm:$0xff]
        %v533 = vld [vmem:[%s279 + $0x170] sm:$0xf]
        %v534 = vld [vmem:[%s279 + $0x174] sm:$0xff]
        %v535 = vld [vmem:[%s279 + $0x17c] sm:$0xf]
        %v536 = vld [vmem:[#allocation6] sm:$0xff]
        %v537 = vld [vmem:[#allocation6 + $0x8] sm:$0xff]
        %v538 = vld [vmem:[#allocation6 + $0x10] sm:$0xff]
        %v539 = vld [vmem:[#allocation6 + $0x18] sm:$0xff]
        %v540 = vld [vmem:[#allocation6 + $0x20] sm:$0xff]
        %v541 = vld [vmem:[#allocation6 + $0x28] sm:$0xff]
        %v542 = vld [vmem:[#allocation6 + $0x30] sm:$0xff]
        %v543 = vld [vmem:[#allocation6 + $0x38] sm:$0xff]
        %v544 = vld [vmem:[#allocation6 + $0x40] sm:$0xff]
        %v545 = vld [vmem:[#allocation6 + $0x48] sm:$0xff]
        %v546 = vld [vmem:[#allocation6 + $0x50] sm:$0xff]
        %v547 = vld [vmem:[#allocation6 + $0x58] sm:$0xff]
        %v548 = vld [vmem:[#allocation6 + $0x60] sm:$0xff]
        %v549 = vld [vmem:[#allocation6 + $0x68] sm:$0xff]
        %v550 = vld [vmem:[#allocation6 + $0x70] sm:$0xff]
        %v551 = vld [vmem:[#allocation6 + $0x78] sm:$0xff]
        %v552 = vld [vmem:[#allocation6 + $0x80] sm:$0xff]
        %v553 = vld [vmem:[#allocation6 + $0x88] sm:$0xff]
        %v554 = vld [vmem:[#allocation6 + $0x90] sm:$0xff]
        %v555 = vld [vmem:[#allocation6 + $0x98] sm:$0xff]
        %v556 = vld [vmem:[#allocation6 + $0xa0] sm:$0xff]
        %v557 = vld [vmem:[#allocation6 + $0xa8] sm:$0xff]
        %v558 = vld [vmem:[#allocation6 + $0xb0] sm:$0xff]
        %v559 = vld [vmem:[#allocation6 + $0xb8] sm:$0xff]
        %v560 = vld [vmem:[#allocation6 + $0xc0] sm:$0xff]
        %v561 = vld [vmem:[#allocation6 + $0xc8] sm:$0xff]
        %v562 = vld [vmem:[#allocation6 + $0xd0] sm:$0xff]
        %v563 = vld [vmem:[#allocation6 + $0xd8] sm:$0xff]
        %v564 = vld [vmem:[#allocation6 + $0xe0] sm:$0xff]
        %v565 = vld [vmem:[#allocation6 + $0xe8] sm:$0xff]
        %v566 = vld [vmem:[#allocation6 + $0xf0] sm:$0xff]
        %v567 = vld [vmem:[#allocation6 + $0xf8] sm:$0xff]
        %v568 = vld [vmem:[#allocation6 + $0x100] sm:$0xff]
        %v569 = vld [vmem:[#allocation6 + $0x108] sm:$0xff]
        %v570 = vld [vmem:[#allocation6 + $0x110] sm:$0xff]
        %v571 = vld [vmem:[#allocation6 + $0x118] sm:$0xff]
        %v572 = vld [vmem:[#allocation6 + $0x120] sm:$0xff]
        %v573 = vld [vmem:[#allocation6 + $0x128] sm:$0xff]
        %v574 = vld [vmem:[#allocation6 + $0x130] sm:$0xff]
        %v575 = vld [vmem:[#allocation6 + $0x138] sm:$0xff]
        %v576 = vld [vmem:[#allocation6 + $0x140] sm:$0xff]
        %v577 = vld [vmem:[#allocation6 + $0x148] sm:$0xff]
        %v578 = vld [vmem:[#allocation6 + $0x150] sm:$0xff]
        %v579 = vld [vmem:[#allocation6 + $0x158] sm:$0xff]
        %v580 = vld [vmem:[#allocation6 + $0x160] sm:$0xff]
        %v581 = vld [vmem:[#allocation6 + $0x168] sm:$0xff]
        %v582 = vld [vmem:[#allocation6 + $0x170] sm:$0xff]
        %v583 = vld [vmem:[#allocation6 + $0x178] sm:$0xff]
        %v648 = vunpack.c.l.b16 %v472
        %v649 = vunpack.c.h.b16 %v472
        %v650 = vunpack.c.l.b16 %v473
        %v651 = vunpack.c.l.b16 %v474
        %v652 = vunpack.c.h.b16 %v474
        %v653 = vunpack.c.l.b16 %v475
        %v654 = vunpack.c.l.b16 %v476
        %v655 = vunpack.c.h.b16 %v476
        %v656 = vunpack.c.l.b16 %v477
        %v657 = vunpack.c.l.b16 %v478
        %v658 = vunpack.c.h.b16 %v478
        %v659 = vunpack.c.l.b16 %v479
        %v660 = vunpack.c.l.b16 %v480
        %v661 = vunpack.c.h.b16 %v480
        %v662 = vunpack.c.l.b16 %v481
        %v663 = vunpack.c.l.b16 %v482
        %v664 = vunpack.c.h.b16 %v482
        %v665 = vunpack.c.l.b16 %v483
        %v666 = vunpack.c.l.b16 %v484
        %v667 = vunpack.c.h.b16 %v484
        %v668 = vunpack.c.l.b16 %v485
        %v669 = vunpack.c.l.b16 %v486
        %v670 = vunpack.c.h.b16 %v486
        %v671 = vunpack.c.l.b16 %v487
        %v672 = vunpack.c.l.b16 %v488
        %v673 = vunpack.c.h.b16 %v488
        %v674 = vunpack.c.l.b16 %v489
        %v675 = vunpack.c.l.b16 %v490
        %v676 = vunpack.c.h.b16 %v490
        %v677 = vunpack.c.l.b16 %v491
        %v678 = vunpack.c.l.b16 %v492
        %v679 = vunpack.c.h.b16 %v492
        %v680 = vunpack.c.l.b16 %v493
        %v681 = vunpack.c.l.b16 %v494
        %v682 = vunpack.c.h.b16 %v494
        %v683 = vunpack.c.l.b16 %v495
        %v684 = vunpack.c.l.b16 %v496
        %v685 = vunpack.c.h.b16 %v496
        %v686 = vunpack.c.l.b16 %v497
        %v687 = vunpack.c.l.b16 %v498
        %v688 = vunpack.c.h.b16 %v498
        %v689 = vunpack.c.l.b16 %v499
        %v690 = vunpack.c.l.b16 %v500
        %v691 = vunpack.c.h.b16 %v500
        %v692 = vunpack.c.l.b16 %v501
        %v693 = vunpack.c.l.b16 %v502
        %v694 = vunpack.c.h.b16 %v502
        %v695 = vunpack.c.l.b16 %v503
        %v696 = vunpack.c.l.b16 %v504
        %v697 = vunpack.c.h.b16 %v504
        %v698 = vunpack.c.l.b16 %v505
        %v699 = vunpack.c.l.b16 %v506
        %v700 = vunpack.c.h.b16 %v506
        %v701 = vunpack.c.l.b16 %v507
        %v702 = vunpack.c.l.b16 %v508
        %v703 = vunpack.c.h.b16 %v508
        %v704 = vunpack.c.l.b16 %v509
        %v705 = vunpack.c.l.b16 %v510
        %v706 = vunpack.c.h.b16 %v510
        %v707 = vunpack.c.l.b16 %v511
        %v708 = vunpack.c.l.b16 %v512
        %v709 = vunpack.c.h.b16 %v512
        %v710 = vunpack.c.l.b16 %v513
        %v711 = vunpack.c.l.b16 %v514
        %v712 = vunpack.c.h.b16 %v514
        %v713 = vunpack.c.l.b16 %v515
        %v714 = vunpack.c.l.b16 %v516
        %v715 = vunpack.c.h.b16 %v516
        %v716 = vunpack.c.l.b16 %v517
        %v717 = vunpack.c.l.b16 %v518
        %v718 = vunpack.c.h.b16 %v518
        %v719 = vunpack.c.l.b16 %v519
        %v720 = vunpack.c.l.b16 %v520
        %v721 = vunpack.c.h.b16 %v520
        %v722 = vunpack.c.l.b16 %v521
        %v723 = vunpack.c.l.b16 %v522
        %v724 = vunpack.c.h.b16 %v522
        %v725 = vunpack.c.l.b16 %v523
        %v726 = vunpack.c.l.b16 %v524
        %v727 = vunpack.c.h.b16 %v524
        %v728 = vunpack.c.l.b16 %v525
        %v729 = vunpack.c.l.b16 %v526
        %v730 = vunpack.c.h.b16 %v526
        %v731 = vunpack.c.l.b16 %v527
        %v732 = vunpack.c.l.b16 %v528
        %v733 = vunpack.c.h.b16 %v528
        %v734 = vunpack.c.l.b16 %v529
        %v735 = vunpack.c.l.b16 %v530
        %v736 = vunpack.c.h.b16 %v530
        %v737 = vunpack.c.l.b16 %v531
        %v738 = vunpack.c.l.b16 %v532
        %v739 = vunpack.c.h.b16 %v532
        %v740 = vunpack.c.l.b16 %v533
        %v741 = vunpack.c.l.b16 %v534
        %v742 = vunpack.c.h.b16 %v534
        %v743 = vunpack.c.l.b16 %v535
        %v744 = vpack.c.b16 %v651, %v648
        %v745 = vpack.c.b16 %v652, %v649
        %v746 = vpack.c.b16 %v653, %v650
        %v747 = vpack.c.b16 %v657, %v654
        %v748 = vpack.c.b16 %v658, %v655
        %v749 = vpack.c.b16 %v659, %v656
        %v750 = vpack.c.b16 %v663, %v660
        %v751 = vpack.c.b16 %v664, %v661
        %v752 = vpack.c.b16 %v665, %v662
        %v753 = vpack.c.b16 %v669, %v666
        %v754 = vpack.c.b16 %v670, %v667
        %v755 = vpack.c.b16 %v671, %v668
        %v756 = vpack.c.b16 %v675, %v672
        %v757 = vpack.c.b16 %v676, %v673
        %v758 = vpack.c.b16 %v677, %v674
        %v759 = vpack.c.b16 %v681, %v678
        %v760 = vpack.c.b16 %v682, %v679
        %v761 = vpack.c.b16 %v683, %v680
        %v762 = vpack.c.b16 %v687, %v684
        %v763 = vpack.c.b16 %v688, %v685
        %v764 = vpack.c.b16 %v689, %v686
        %v765 = vpack.c.b16 %v693, %v690
        %v766 = vpack.c.b16 %v694, %v691
        %v767 = vpack.c.b16 %v695, %v692
        %v768 = vpack.c.b16 %v699, %v696
        %v769 = vpack.c.b16 %v700, %v697
        %v770 = vpack.c.b16 %v701, %v698
        %v771 = vpack.c.b16 %v705, %v702
        %v772 = vpack.c.b16 %v706, %v703
        %v773 = vpack.c.b16 %v707, %v704
        %v774 = vpack.c.b16 %v711, %v708
        %v775 = vpack.c.b16 %v712, %v709
        %v776 = vpack.c.b16 %v713, %v710
        %v777 = vpack.c.b16 %v717, %v714
        %v778 = vpack.c.b16 %v718, %v715
        %v779 = vpack.c.b16 %v719, %v716
        %v780 = vpack.c.b16 %v723, %v720
        %v781 = vpack.c.b16 %v724, %v721
        %v782 = vpack.c.b16 %v725, %v722
        %v783 = vpack.c.b16 %v729, %v726
        %v784 = vpack.c.b16 %v730, %v727
        %v785 = vpack.c.b16 %v731, %v728
        %v786 = vpack.c.b16 %v735, %v732
        %v787 = vpack.c.b16 %v736, %v733
        %v788 = vpack.c.b16 %v737, %v734
        %v789 = vpack.c.b16 %v741, %v738
        %v790 = vpack.c.b16 %v742, %v739
        %v791 = vpack.c.b16 %v743, %v740
        %v888 = vunpack.c.l.b16 %v536
        %v889 = vunpack.c.h.b16 %v536
        %v890 = vunpack.c.l.b16 %v537
        %v891 = vunpack.c.h.b16 %v537
        %v892 = vunpack.c.l.b16 %v538
        %v893 = vunpack.c.h.b16 %v538
        %v894 = vunpack.c.l.b16 %v539
        %v895 = vunpack.c.h.b16 %v539
        %v896 = vunpack.c.l.b16 %v540
        %v897 = vunpack.c.h.b16 %v540
        %v898 = vunpack.c.l.b16 %v541
        %v899 = vunpack.c.h.b16 %v541
        %v900 = vunpack.c.l.b16 %v542
        %v901 = vunpack.c.h.b16 %v542
        %v902 = vunpack.c.l.b16 %v543
        %v903 = vunpack.c.h.b16 %v543
        %v904 = vunpack.c.l.b16 %v544
        %v905 = vunpack.c.h.b16 %v544
        %v906 = vunpack.c.l.b16 %v545
        %v907 = vunpack.c.h.b16 %v545
        %v908 = vunpack.c.l.b16 %v546
        %v909 = vunpack.c.h.b16 %v546
        %v910 = vunpack.c.l.b16 %v547
        %v911 = vunpack.c.h.b16 %v547
        %v912 = vunpack.c.l.b16 %v548
        %v913 = vunpack.c.h.b16 %v548
        %v914 = vunpack.c.l.b16 %v549
        %v915 = vunpack.c.h.b16 %v549
        %v916 = vunpack.c.l.b16 %v550
        %v917 = vunpack.c.h.b16 %v550
        %v918 = vunpack.c.l.b16 %v551
        %v919 = vunpack.c.h.b16 %v551
        %v920 = vunpack.c.l.b16 %v552
        %v921 = vunpack.c.h.b16 %v552
        %v922 = vunpack.c.l.b16 %v553
        %v923 = vunpack.c.h.b16 %v553
        %v924 = vunpack.c.l.b16 %v554
        %v925 = vunpack.c.h.b16 %v554
        %v926 = vunpack.c.l.b16 %v555
        %v927 = vunpack.c.h.b16 %v555
        %v928 = vunpack.c.l.b16 %v556
        %v929 = vunpack.c.h.b16 %v556
        %v930 = vunpack.c.l.b16 %v557
        %v931 = vunpack.c.h.b16 %v557
        %v932 = vunpack.c.l.b16 %v558
        %v933 = vunpack.c.h.b16 %v558
        %v934 = vunpack.c.l.b16 %v559
        %v935 = vunpack.c.h.b16 %v559
        %v936 = vunpack.c.l.b16 %v560
        %v937 = vunpack.c.h.b16 %v560
        %v938 = vunpack.c.l.b16 %v561
        %v939 = vunpack.c.h.b16 %v561
        %v940 = vunpack.c.l.b16 %v562
        %v941 = vunpack.c.h.b16 %v562
        %v942 = vunpack.c.l.b16 %v563
        %v943 = vunpack.c.h.b16 %v563
        %v944 = vunpack.c.l.b16 %v564
        %v945 = vunpack.c.h.b16 %v564
        %v946 = vunpack.c.l.b16 %v565
        %v947 = vunpack.c.h.b16 %v565
        %v948 = vunpack.c.l.b16 %v566
        %v949 = vunpack.c.h.b16 %v566
        %v950 = vunpack.c.l.b16 %v567
        %v951 = vunpack.c.h.b16 %v567
        %v952 = vunpack.c.l.b16 %v568
        %v953 = vunpack.c.h.b16 %v568
        %v954 = vunpack.c.l.b16 %v569
        %v955 = vunpack.c.h.b16 %v569
        %v956 = vunpack.c.l.b16 %v570
        %v957 = vunpack.c.h.b16 %v570
        %v958 = vunpack.c.l.b16 %v571
        %v959 = vunpack.c.h.b16 %v571
        %v960 = vunpack.c.l.b16 %v572
        %v961 = vunpack.c.h.b16 %v572
        %v962 = vunpack.c.l.b16 %v573
        %v963 = vunpack.c.h.b16 %v573
        %v964 = vunpack.c.l.b16 %v574
        %v965 = vunpack.c.h.b16 %v574
        %v966 = vunpack.c.l.b16 %v575
        %v967 = vunpack.c.h.b16 %v575
        %v968 = vunpack.c.l.b16 %v576
        %v969 = vunpack.c.h.b16 %v576
        %v970 = vunpack.c.l.b16 %v577
        %v971 = vunpack.c.h.b16 %v577
        %v972 = vunpack.c.l.b16 %v578
        %v973 = vunpack.c.h.b16 %v578
        %v974 = vunpack.c.l.b16 %v579
        %v975 = vunpack.c.h.b16 %v579
        %v976 = vunpack.c.l.b16 %v580
        %v977 = vunpack.c.h.b16 %v580
        %v978 = vunpack.c.l.b16 %v581
        %v979 = vunpack.c.h.b16 %v581
        %v980 = vunpack.c.l.b16 %v582
        %v981 = vunpack.c.h.b16 %v582
        %v982 = vunpack.c.l.b16 %v583
        %v983 = vunpack.c.h.b16 %v583
        %v984 = vpack.c.b16 %v890, %v888
        %v985 = vpack.c.b16 %v891, %v889
        %v986 = vpack.c.b16 %v894, %v892
        %v987 = vpack.c.b16 %v895, %v893
        %v988 = vpack.c.b16 %v898, %v896
        %v989 = vpack.c.b16 %v899, %v897
        %v990 = vpack.c.b16 %v902, %v900
        %v991 = vpack.c.b16 %v903, %v901
        %v992 = vpack.c.b16 %v906, %v904
        %v993 = vpack.c.b16 %v907, %v905
        %v994 = vpack.c.b16 %v910, %v908
        %v995 = vpack.c.b16 %v911, %v909
        %v996 = vpack.c.b16 %v914, %v912
        %v997 = vpack.c.b16 %v915, %v913
        %v998 = vpack.c.b16 %v918, %v916
        %v999 = vpack.c.b16 %v919, %v917
        %v1000 = vpack.c.b16 %v922, %v920
        %v1001 = vpack.c.b16 %v923, %v921
        %v1002 = vpack.c.b16 %v926, %v924
        %v1003 = vpack.c.b16 %v927, %v925
        %v1004 = vpack.c.b16 %v930, %v928
        %v1005 = vpack.c.b16 %v931, %v929
        %v1006 = vpack.c.b16 %v934, %v932
        %v1007 = vpack.c.b16 %v935, %v933
        %v1008 = vpack.c.b16 %v938, %v936
        %v1009 = vpack.c.b16 %v939, %v937
        %v1010 = vpack.c.b16 %v942, %v940
        %v1011 = vpack.c.b16 %v943, %v941
        %v1012 = vpack.c.b16 %v946, %v944
        %v1013 = vpack.c.b16 %v947, %v945
        %v1014 = vpack.c.b16 %v950, %v948
        %v1015 = vpack.c.b16 %v951, %v949
        %v1016 = vpack.c.b16 %v954, %v952
        %v1017 = vpack.c.b16 %v955, %v953
        %v1018 = vpack.c.b16 %v958, %v956
        %v1019 = vpack.c.b16 %v959, %v957
        %v1020 = vpack.c.b16 %v962, %v960
        %v1021 = vpack.c.b16 %v963, %v961
        %v1022 = vpack.c.b16 %v966, %v964
        %v1023 = vpack.c.b16 %v967, %v965
        %v1024 = vpack.c.b16 %v970, %v968
        %v1025 = vpack.c.b16 %v971, %v969
        %v1026 = vpack.c.b16 %v974, %v972
        %v1027 = vpack.c.b16 %v975, %v973
        %v1028 = vpack.c.b16 %v978, %v976
        %v1029 = vpack.c.b16 %v979, %v977
        %v1030 = vpack.c.b16 %v982, %v980
        %v1031 = vpack.c.b16 %v983, %v981
        %1080 = vmatprep.subr.bf16.mxu0 %v999
        %1081 = vmatpush1.bf16.msra.mxu0 %v998
        %1082 = vmatprep.subr.bf16.mxu0 %v997
        %1083 = vmatpush1.bf16.msra.mxu0 %v996
        %1084 = vmatprep.subr.bf16.mxu0 %v995
        %1085 = vmatpush1.bf16.msra.mxu0 %v994
        %1086 = vmatprep.subr.bf16.mxu0 %v993
        %1087 = vmatpush1.bf16.msra.mxu0 %v992
        %1088 = vmatprep.subr.bf16.mxu0 %v991
        %1089 = vmatpush1.bf16.msra.mxu0 %v990
        %1090 = vmatprep.subr.bf16.mxu0 %v989
        %1091 = vmatpush1.bf16.msra.mxu0 %v988
        %1092 = vmatprep.subr.bf16.mxu0 %v987
        %1093 = vmatpush1.bf16.msra.mxu0 %v986
        %1094 = vmatprep.subr.bf16.mxu0 %v985
        %1095 = vmatpush1.bf16.msra.mxu0 %v984
        %1096 = vmatprep.subr.bf16.mxu0 %v1015
        %1097 = vmatpush2.bf16.msra.mxu0 %v1014
        %1098 = vmatprep.subr.bf16.mxu0 %v1013
        %1099 = vmatpush2.bf16.msra.mxu0 %v1012
        %1100 = vmatprep.subr.bf16.mxu0 %v1011
        %1101 = vmatpush2.bf16.msra.mxu0 %v1010
        %1102 = vmatprep.subr.bf16.mxu0 %v1009
        %1103 = vmatpush2.bf16.msra.mxu0 %v1008
        %1104 = vmatprep.subr.bf16.mxu0 %v1007
        %1105 = vmatpush2.bf16.msra.mxu0 %v1006
        %1106 = vmatprep.subr.bf16.mxu0 %v1005
        %1107 = vmatpush2.bf16.msra.mxu0 %v1004
        %1108 = vmatprep.subr.bf16.mxu0 %v1003
        %1109 = vmatpush2.bf16.msra.mxu0 %v1002
        %1110 = vmatprep.subr.bf16.mxu0 %v1001
        %1111 = vmatpush2.bf16.msra.mxu0 %v1000
        %1112 = vmatprep.mubr.bf16.mxu0 %v745
        %1113 = vmatmul.mubr.bf16.gmra.mxu0 %v744
        %v1114 = vpop.f32.mrf.mxu0
        %v1115 = vadd.f32 0.0, %v1114
        %v1116 = vpop.f32.mrf.mxu0
        %v1117 = vadd.f32 0.0, %v1116
        %v1118 = vpop.f32.mrf.mxu0
        %v1119 = vadd.f32 0.0, %v1118
        %v1120 = vpop.f32.mrf.mxu0
        %v1121 = vadd.f32 0.0, %v1120
        %1122 = vmatprep.mubr.bf16.mxu0 %v748
        %1123 = vmatmul.mubr.bf16.gmra.mxu0 %v747
        %v1124 = vpop.f32.mrf.mxu0
        %v1125 = vadd.f32 0.0, %v1124
        %v1126 = vpop.f32.mrf.mxu0
        %v1127 = vadd.f32 0.0, %v1126
        %v1128 = vpop.f32.mrf.mxu0
        %v1129 = vadd.f32 0.0, %v1128
        %v1130 = vpop.f32.mrf.mxu0
        %v1131 = vadd.f32 0.0, %v1130
        %1132 = vmatprep.mubr.bf16.mxu0 %v751
        %1133 = vmatmul.mubr.bf16.gmra.mxu0 %v750
        %v1134 = vpop.f32.mrf.mxu0
        %v1135 = vadd.f32 0.0, %v1134
        %v1136 = vpop.f32.mrf.mxu0
        %v1137 = vadd.f32 0.0, %v1136
        %v1138 = vpop.f32.mrf.mxu0
        %v1139 = vadd.f32 0.0, %v1138
        %v1140 = vpop.f32.mrf.mxu0
        %v1141 = vadd.f32 0.0, %v1140
        %1142 = vmatprep.mubr.bf16.mxu0 %v754
        %1143 = vmatmul.mubr.bf16.gmra.mxu0 %v753
        %v1144 = vpop.f32.mrf.mxu0
        %v1145 = vadd.f32 0.0, %v1144
        %v1146 = vpop.f32.mrf.mxu0
        %v1147 = vadd.f32 0.0, %v1146
        %v1148 = vpop.f32.mrf.mxu0
        %v1149 = vadd.f32 0.0, %v1148
        %v1150 = vpop.f32.mrf.mxu0
        %v1151 = vadd.f32 0.0, %v1150
        %1152 = vmatprep.mubr.bf16.mxu0 %v757
        %1153 = vmatmul.mubr.bf16.gmra.mxu0 %v756
        %v1154 = vpop.f32.mrf.mxu0
        %v1155 = vadd.f32 0.0, %v1154
        %v1156 = vpop.f32.mrf.mxu0
        %v1157 = vadd.f32 0.0, %v1156
        %v1158 = vpop.f32.mrf.mxu0
        %v1159 = vadd.f32 0.0, %v1158
        %v1160 = vpop.f32.mrf.mxu0
        %v1161 = vadd.f32 0.0, %v1160
        %1162 = vmatprep.mubr.bf16.mxu0 %v760
        %1163 = vmatmul.mubr.bf16.gmra.mxu0 %v759
        %v1164 = vpop.f32.mrf.mxu0
        %v1165 = vadd.f32 0.0, %v1164
        %v1166 = vpop.f32.mrf.mxu0
        %v1167 = vadd.f32 0.0, %v1166
        %v1168 = vpop.f32.mrf.mxu0
        %v1169 = vadd.f32 0.0, %v1168
        %v1170 = vpop.f32.mrf.mxu0
        %v1171 = vadd.f32 0.0, %v1170
        %1172 = vmatprep.mubr.bf16.mxu0 %v763
        %1173 = vmatmul.mubr.bf16.gmra.mxu0 %v762
        %v1174 = vpop.f32.mrf.mxu0
        %v1175 = vadd.f32 0.0, %v1174
        %v1176 = vpop.f32.mrf.mxu0
        %v1177 = vadd.f32 0.0, %v1176
        %v1178 = vpop.f32.mrf.mxu0
        %v1179 = vadd.f32 0.0, %v1178
        %v1180 = vpop.f32.mrf.mxu0
        %v1181 = vadd.f32 0.0, %v1180
        %1182 = vmatprep.mubr.bf16.mxu0 %v766
        %1183 = vmatmul.mubr.bf16.gmra.mxu0 %v765
        %v1184 = vpop.f32.mrf.mxu0
        %v1185 = vadd.f32 0.0, %v1184
        %v1186 = vpop.f32.mrf.mxu0
        %v1187 = vadd.f32 0.0, %v1186
        %v1188 = vpop.f32.mrf.mxu0
        %v1189 = vadd.f32 0.0, %v1188
        %v1190 = vpop.f32.mrf.mxu0
        %v1191 = vadd.f32 0.0, %v1190
        %1192 = vmatprep.mubr.bf16.mxu0 %v769
        %1193 = vmatmul.mubr.bf16.gmra.mxu0 %v768
        %v1194 = vpop.f32.mrf.mxu0
        %v1195 = vadd.f32 0.0, %v1194
        %v1196 = vpop.f32.mrf.mxu0
        %v1197 = vadd.f32 0.0, %v1196
        %v1198 = vpop.f32.mrf.mxu0
        %v1199 = vadd.f32 0.0, %v1198
        %v1200 = vpop.f32.mrf.mxu0
        %v1201 = vadd.f32 0.0, %v1200
        %1202 = vmatprep.mubr.bf16.mxu0 %v772
        %1203 = vmatmul.mubr.bf16.gmra.mxu0 %v771
        %v1204 = vpop.f32.mrf.mxu0
        %v1205 = vadd.f32 0.0, %v1204
        %v1206 = vpop.f32.mrf.mxu0
        %v1207 = vadd.f32 0.0, %v1206
        %v1208 = vpop.f32.mrf.mxu0
        %v1209 = vadd.f32 0.0, %v1208
        %v1210 = vpop.f32.mrf.mxu0
        %v1211 = vadd.f32 0.0, %v1210
        %1212 = vmatprep.mubr.bf16.mxu0 %v775
        %1213 = vmatmul.mubr.bf16.gmra.mxu0 %v774
        %v1214 = vpop.f32.mrf.mxu0
        %v1215 = vadd.f32 0.0, %v1214
        %v1216 = vpop.f32.mrf.mxu0
        %v1217 = vadd.f32 0.0, %v1216
        %v1218 = vpop.f32.mrf.mxu0
        %v1219 = vadd.f32 0.0, %v1218
        %v1220 = vpop.f32.mrf.mxu0
        %v1221 = vadd.f32 0.0, %v1220
        %1222 = vmatprep.mubr.bf16.mxu0 %v778
        %1223 = vmatmul.mubr.bf16.gmra.mxu0 %v777
        %v1224 = vpop.f32.mrf.mxu0
        %v1225 = vadd.f32 0.0, %v1224
        %v1226 = vpop.f32.mrf.mxu0
        %v1227 = vadd.f32 0.0, %v1226
        %v1228 = vpop.f32.mrf.mxu0
        %v1229 = vadd.f32 0.0, %v1228
        %v1230 = vpop.f32.mrf.mxu0
        %v1231 = vadd.f32 0.0, %v1230
        %1232 = vmatprep.mubr.bf16.mxu0 %v781
        %1233 = vmatmul.mubr.bf16.gmra.mxu0 %v780
        %v1234 = vpop.f32.mrf.mxu0
        %v1235 = vadd.f32 0.0, %v1234
        %v1236 = vpop.f32.mrf.mxu0
        %v1237 = vadd.f32 0.0, %v1236
        %v1238 = vpop.f32.mrf.mxu0
        %v1239 = vadd.f32 0.0, %v1238
        %v1240 = vpop.f32.mrf.mxu0
        %v1241 = vadd.f32 0.0, %v1240
        %1242 = vmatprep.mubr.bf16.mxu0 %v784
        %1243 = vmatmul.mubr.bf16.gmra.mxu0 %v783
        %v1244 = vpop.f32.mrf.mxu0
        %v1245 = vadd.f32 0.0, %v1244
        %v1246 = vpop.f32.mrf.mxu0
        %v1247 = vadd.f32 0.0, %v1246
        %v1248 = vpop.f32.mrf.mxu0
        %v1249 = vadd.f32 0.0, %v1248
        %v1250 = vpop.f32.mrf.mxu0
        %v1251 = vadd.f32 0.0, %v1250
        %1252 = vmatprep.mubr.bf16.mxu0 %v787
        %1253 = vmatmul.mubr.bf16.gmra.mxu0 %v786
        %v1254 = vpop.f32.mrf.mxu0
        %v1255 = vadd.f32 0.0, %v1254
        %v1256 = vpop.f32.mrf.mxu0
        %v1257 = vadd.f32 0.0, %v1256
        %v1258 = vpop.f32.mrf.mxu0
        %v1259 = vadd.f32 0.0, %v1258
        %v1260 = vpop.f32.mrf.mxu0
        %v1261 = vadd.f32 0.0, %v1260
        %1262 = vmatprep.mubr.bf16.mxu0 %v790
        %1263 = vmatmul.mubr.bf16.gmra.mxu0 %v789
        %v1264 = vpop.f32.mrf.mxu0
        %v1265 = vadd.f32 0.0, %v1264
        %v1266 = vpop.f32.mrf.mxu0
        %v1267 = vadd.f32 0.0, %v1266
        %v1268 = vpop.f32.mrf.mxu0
        %v1269 = vadd.f32 0.0, %v1268
        %v1270 = vpop.f32.mrf.mxu0
        %v1271 = vadd.f32 0.0, %v1270
        %1272 = vdwg.mxu0
        %1273 = vmatprep.subr.bf16.mxu0 %v1031
        %1274 = vmatpush1.bf16.msra.mxu0 %v1030
        %1275 = vmatprep.subr.bf16.mxu0 %v1029
        %1276 = vmatpush1.bf16.msra.mxu0 %v1028
        %1277 = vmatprep.subr.bf16.mxu0 %v1027
        %1278 = vmatpush1.bf16.msra.mxu0 %v1026
        %1279 = vmatprep.subr.bf16.mxu0 %v1025
        %1280 = vmatpush1.bf16.msra.mxu0 %v1024
        %1281 = vmatprep.subr.bf16.mxu0 %v1023
        %1282 = vmatpush1.bf16.msra.mxu0 %v1022
        %1283 = vmatprep.subr.bf16.mxu0 %v1021
        %1284 = vmatpush1.bf16.msra.mxu0 %v1020
        %1285 = vmatprep.subr.bf16.mxu0 %v1019
        %1286 = vmatpush1.bf16.msra.mxu0 %v1018
        %1287 = vmatprep.subr.bf16.mxu0 %v1017
        %1288 = vmatpush1.bf16.msra.mxu0 %v1016
        %1289 = vmatprep.subr.bf16.mxu0 0
        %1290 = vmatpush2.bf16.msra.mxu0 0
        %1291 = vmatprep.subr.bf16.mxu0 0
        %1292 = vmatpush2.bf16.msra.mxu0 0
        %1293 = vmatprep.subr.bf16.mxu0 0
        %1294 = vmatpush2.bf16.msra.mxu0 0
        %1295 = vmatprep.subr.bf16.mxu0 0
        %1296 = vmatpush2.bf16.msra.mxu0 0
        %1297 = vmatprep.subr.bf16.mxu0 0
        %1298 = vmatpush2.bf16.msra.mxu0 0
        %1299 = vmatprep.subr.bf16.mxu0 0
        %1300 = vmatpush2.bf16.msra.mxu0 0
        %1301 = vmatprep.subr.bf16.mxu0 0
        %1302 = vmatpush2.bf16.msra.mxu0 0
        %1303 = vmatprep.subr.bf16.mxu0 0
        %1304 = vmatpush2.bf16.msra.mxu0 0
        %1305 = vmatprep.mubr.bf16.mxu0 0
        %1306 = vmatmul.mubr.bf16.gmra.mxu0 %v746
        %v1307 = vpop.f32.mrf.mxu0
        %v1308 = vadd.f32 %v1115, %v1307
        %v1309 = vpop.f32.mrf.mxu0
        %v1310 = vadd.f32 %v1117, %v1309
        %v1311 = vpop.f32.mrf.mxu0
        %v1312 = vadd.f32 %v1119, %v1311
        %v1313 = vpop.f32.mrf.mxu0
        %v1314 = vadd.f32 %v1121, %v1313
        %1315 = vmatprep.mubr.bf16.mxu0 0
        %1316 = vmatmul.mubr.bf16.gmra.mxu0 %v749
        %v1317 = vpop.f32.mrf.mxu0
        %v1318 = vadd.f32 %v1125, %v1317
        %v1319 = vpop.f32.mrf.mxu0
        %v1320 = vadd.f32 %v1127, %v1319
        %v1321 = vpop.f32.mrf.mxu0
        %v1322 = vadd.f32 %v1129, %v1321
        %v1323 = vpop.f32.mrf.mxu0
        %v1324 = vadd.f32 %v1131, %v1323
        %1325 = vmatprep.mubr.bf16.mxu0 0
        %1326 = vmatmul.mubr.bf16.gmra.mxu0 %v752
        %v1327 = vpop.f32.mrf.mxu0
        %v1328 = vadd.f32 %v1135, %v1327
        %v1329 = vpop.f32.mrf.mxu0
        %v1330 = vadd.f32 %v1137, %v1329
        %v1331 = vpop.f32.mrf.mxu0
        %v1332 = vadd.f32 %v1139, %v1331
        %v1333 = vpop.f32.mrf.mxu0
        %v1334 = vadd.f32 %v1141, %v1333
        %1335 = vmatprep.mubr.bf16.mxu0 0
        %1336 = vmatmul.mubr.bf16.gmra.mxu0 %v755
        %v1337 = vpop.f32.mrf.mxu0
        %v1338 = vadd.f32 %v1145, %v1337
        %v1339 = vpop.f32.mrf.mxu0
        %v1340 = vadd.f32 %v1147, %v1339
        %v1341 = vpop.f32.mrf.mxu0
        %v1342 = vadd.f32 %v1149, %v1341
        %v1343 = vpop.f32.mrf.mxu0
        %v1344 = vadd.f32 %v1151, %v1343
        %1345 = vmatprep.mubr.bf16.mxu0 0
        %1346 = vmatmul.mubr.bf16.gmra.mxu0 %v758
        %v1347 = vpop.f32.mrf.mxu0
        %v1348 = vadd.f32 %v1155, %v1347
        %v1349 = vpop.f32.mrf.mxu0
        %v1350 = vadd.f32 %v1157, %v1349
        %v1351 = vpop.f32.mrf.mxu0
        %v1352 = vadd.f32 %v1159, %v1351
        %v1353 = vpop.f32.mrf.mxu0
        %v1354 = vadd.f32 %v1161, %v1353
        %1355 = vmatprep.mubr.bf16.mxu0 0
        %1356 = vmatmul.mubr.bf16.gmra.mxu0 %v761
        %v1357 = vpop.f32.mrf.mxu0
        %v1358 = vadd.f32 %v1165, %v1357
        %v1359 = vpop.f32.mrf.mxu0
        %v1360 = vadd.f32 %v1167, %v1359
        %v1361 = vpop.f32.mrf.mxu0
        %v1362 = vadd.f32 %v1169, %v1361
        %v1363 = vpop.f32.mrf.mxu0
        %v1364 = vadd.f32 %v1171, %v1363
        %1365 = vmatprep.mubr.bf16.mxu0 0
        %1366 = vmatmul.mubr.bf16.gmra.mxu0 %v764
        %v1367 = vpop.f32.mrf.mxu0
        %v1368 = vadd.f32 %v1175, %v1367
        %v1369 = vpop.f32.mrf.mxu0
        %v1370 = vadd.f32 %v1177, %v1369
        %v1371 = vpop.f32.mrf.mxu0
        %v1372 = vadd.f32 %v1179, %v1371
        %v1373 = vpop.f32.mrf.mxu0
        %v1374 = vadd.f32 %v1181, %v1373
        %1375 = vmatprep.mubr.bf16.mxu0 0
        %1376 = vmatmul.mubr.bf16.gmra.mxu0 %v767
        %v1377 = vpop.f32.mrf.mxu0
        %v1378 = vadd.f32 %v1185, %v1377
        %v1379 = vpop.f32.mrf.mxu0
        %v1380 = vadd.f32 %v1187, %v1379
        %v1381 = vpop.f32.mrf.mxu0
        %v1382 = vadd.f32 %v1189, %v1381
        %v1383 = vpop.f32.mrf.mxu0
        %v1384 = vadd.f32 %v1191, %v1383
        %1385 = vmatprep.mubr.bf16.mxu0 0
        %1386 = vmatmul.mubr.bf16.gmra.mxu0 %v770
        %v1387 = vpop.f32.mrf.mxu0
        %v1388 = vadd.f32 %v1195, %v1387
        %v1389 = vpop.f32.mrf.mxu0
        %v1390 = vadd.f32 %v1197, %v1389
        %v1391 = vpop.f32.mrf.mxu0
        %v1392 = vadd.f32 %v1199, %v1391
        %v1393 = vpop.f32.mrf.mxu0
        %v1394 = vadd.f32 %v1201, %v1393
        %1395 = vmatprep.mubr.bf16.mxu0 0
        %1396 = vmatmul.mubr.bf16.gmra.mxu0 %v773
        %v1397 = vpop.f32.mrf.mxu0
        %v1398 = vadd.f32 %v1205, %v1397
        %v1399 = vpop.f32.mrf.mxu0
        %v1400 = vadd.f32 %v1207, %v1399
        %v1401 = vpop.f32.mrf.mxu0
        %v1402 = vadd.f32 %v1209, %v1401
        %v1403 = vpop.f32.mrf.mxu0
        %v1404 = vadd.f32 %v1211, %v1403
        %1405 = vmatprep.mubr.bf16.mxu0 0
        %1406 = vmatmul.mubr.bf16.gmra.mxu0 %v776
        %v1407 = vpop.f32.mrf.mxu0
        %v1408 = vadd.f32 %v1215, %v1407
        %v1409 = vpop.f32.mrf.mxu0
        %v1410 = vadd.f32 %v1217, %v1409
        %v1411 = vpop.f32.mrf.mxu0
        %v1412 = vadd.f32 %v1219, %v1411
        %v1413 = vpop.f32.mrf.mxu0
        %v1414 = vadd.f32 %v1221, %v1413
        %1415 = vmatprep.mubr.bf16.mxu0 0
        %1416 = vmatmul.mubr.bf16.gmra.mxu0 %v779
        %v1417 = vpop.f32.mrf.mxu0
        %v1418 = vadd.f32 %v1225, %v1417
        %v1419 = vpop.f32.mrf.mxu0
        %v1420 = vadd.f32 %v1227, %v1419
        %v1421 = vpop.f32.mrf.mxu0
        %v1422 = vadd.f32 %v1229, %v1421
        %v1423 = vpop.f32.mrf.mxu0
        %v1424 = vadd.f32 %v1231, %v1423
        %1425 = vmatprep.mubr.bf16.mxu0 0
        %1426 = vmatmul.mubr.bf16.gmra.mxu0 %v782
        %v1427 = vpop.f32.mrf.mxu0
        %v1428 = vadd.f32 %v1235, %v1427
        %v1429 = vpop.f32.mrf.mxu0
        %v1430 = vadd.f32 %v1237, %v1429
        %v1431 = vpop.f32.mrf.mxu0
        %v1432 = vadd.f32 %v1239, %v1431
        %v1433 = vpop.f32.mrf.mxu0
        %v1434 = vadd.f32 %v1241, %v1433
        %1435 = vmatprep.mubr.bf16.mxu0 0
        %1436 = vmatmul.mubr.bf16.gmra.mxu0 %v785
        %v1437 = vpop.f32.mrf.mxu0
        %v1438 = vadd.f32 %v1245, %v1437
        %v1439 = vpop.f32.mrf.mxu0
        %v1440 = vadd.f32 %v1247, %v1439
        %v1441 = vpop.f32.mrf.mxu0
        %v1442 = vadd.f32 %v1249, %v1441
        %v1443 = vpop.f32.mrf.mxu0
        %v1444 = vadd.f32 %v1251, %v1443
        %1445 = vmatprep.mubr.bf16.mxu0 0
        %1446 = vmatmul.mubr.bf16.gmra.mxu0 %v788
        %v1447 = vpop.f32.mrf.mxu0
        %v1448 = vadd.f32 %v1255, %v1447
        %v1449 = vpop.f32.mrf.mxu0
        %v1450 = vadd.f32 %v1257, %v1449
        %v1451 = vpop.f32.mrf.mxu0
        %v1452 = vadd.f32 %v1259, %v1451
        %v1453 = vpop.f32.mrf.mxu0
        %v1454 = vadd.f32 %v1261, %v1453
        %1455 = vmatprep.mubr.bf16.mxu0 0
        %1456 = vmatmul.mubr.bf16.gmra.mxu0 %v791
        %v1457 = vpop.f32.mrf.mxu0
        %v1458 = vadd.f32 %v1265, %v1457
        %v1459 = vpop.f32.mrf.mxu0
        %v1460 = vadd.f32 %v1267, %v1459
        %v1461 = vpop.f32.mrf.mxu0
        %v1462 = vadd.f32 %v1269, %v1461
        %v1463 = vpop.f32.mrf.mxu0
        %v1464 = vadd.f32 %v1271, %v1463
        %1465 = vdwg.mxu0
        %v1466 = vadd.f32 %v408, %v1308
        %v1467 = vadd.f32 %v409, %v1310
        %v1468 = vadd.f32 %v410, %v1312
        %v1469 = vadd.f32 %v411, %v1314
        %v1470 = vadd.f32 %v412, %v1318
        %v1471 = vadd.f32 %v413, %v1320
        %v1472 = vadd.f32 %v414, %v1322
        %v1473 = vadd.f32 %v415, %v1324
        %v1474 = vadd.f32 %v416, %v1328
        %v1475 = vadd.f32 %v417, %v1330
        %v1476 = vadd.f32 %v418, %v1332
        %v1477 = vadd.f32 %v419, %v1334
        %v1478 = vadd.f32 %v420, %v1338
        %v1479 = vadd.f32 %v421, %v1340
        %v1480 = vadd.f32 %v422, %v1342
        %v1481 = vadd.f32 %v423, %v1344
        %v1482 = vadd.f32 %v424, %v1348
        %v1483 = vadd.f32 %v425, %v1350
        %v1484 = vadd.f32 %v426, %v1352
        %v1485 = vadd.f32 %v427, %v1354
        %v1486 = vadd.f32 %v428, %v1358
        %v1487 = vadd.f32 %v429, %v1360
        %v1488 = vadd.f32 %v430, %v1362
        %v1489 = vadd.f32 %v431, %v1364
        %v1490 = vadd.f32 %v432, %v1368
        %v1491 = vadd.f32 %v433, %v1370
        %v1492 = vadd.f32 %v434, %v1372
        %v1493 = vadd.f32 %v435, %v1374
        %v1494 = vadd.f32 %v436, %v1378
        %v1495 = vadd.f32 %v437, %v1380
        %v1496 = vadd.f32 %v438, %v1382
        %v1497 = vadd.f32 %v439, %v1384
        %v1498 = vadd.f32 %v440, %v1388
        %v1499 = vadd.f32 %v441, %v1390
        %v1500 = vadd.f32 %v442, %v1392
        %v1501 = vadd.f32 %v443, %v1394
        %v1502 = vadd.f32 %v444, %v1398
        %v1503 = vadd.f32 %v445, %v1400
        %v1504 = vadd.f32 %v446, %v1402
        %v1505 = vadd.f32 %v447, %v1404
        %v1506 = vadd.f32 %v448, %v1408
        %v1507 = vadd.f32 %v449, %v1410
        %v1508 = vadd.f32 %v450, %v1412
        %v1509 = vadd.f32 %v451, %v1414
        %v1510 = vadd.f32 %v452, %v1418
        %v1511 = vadd.f32 %v453, %v1420
        %v1512 = vadd.f32 %v454, %v1422
        %v1513 = vadd.f32 %v455, %v1424
        %v1514 = vadd.f32 %v456, %v1428
        %v1515 = vadd.f32 %v457, %v1430
        %v1516 = vadd.f32 %v458, %v1432
        %v1517 = vadd.f32 %v459, %v1434
        %v1518 = vadd.f32 %v460, %v1438
        %v1519 = vadd.f32 %v461, %v1440
        %v1520 = vadd.f32 %v462, %v1442
        %v1521 = vadd.f32 %v463, %v1444
        %v1522 = vadd.f32 %v464, %v1448
        %v1523 = vadd.f32 %v465, %v1450
        %v1524 = vadd.f32 %v466, %v1452
        %v1525 = vadd.f32 %v467, %v1454
        %v1526 = vadd.f32 %v468, %v1458
        %v1527 = vadd.f32 %v469, %v1460
        %v1528 = vadd.f32 %v470, %v1462
        %v1529 = vadd.f32 %v471, %v1464
        %1530 = vst [vmem:[#allocation2] sm:$0xff] %v1466
        %1531 = vst [vmem:[#allocation2 + $0x8] sm:$0xff] %v1467
        %1532 = vst [vmem:[#allocation2 + $0x10] sm:$0xff] %v1468
        %1533 = vst [vmem:[#allocation2 + $0x18] sm:$0xff] %v1469
        %1534 = vst [vmem:[#allocation2 + $0x20] sm:$0xff] %v1470
        %1535 = vst [vmem:[#allocation2 + $0x28] sm:$0xff] %v1471
        %1536 = vst [vmem:[#allocation2 + $0x30] sm:$0xff] %v1472
        %1537 = vst [vmem:[#allocation2 + $0x38] sm:$0xff] %v1473
        %1538 = vst [vmem:[#allocation2 + $0x40] sm:$0xff] %v1474
        %1539 = vst [vmem:[#allocation2 + $0x48] sm:$0xff] %v1475
        %1540 = vst [vmem:[#allocation2 + $0x50] sm:$0xff] %v1476
        %1541 = vst [vmem:[#allocation2 + $0x58] sm:$0xff] %v1477
        %1542 = vst [vmem:[#allocation2 + $0x60] sm:$0xff] %v1478
        %1543 = vst [vmem:[#allocation2 + $0x68] sm:$0xff] %v1479
        %1544 = vst [vmem:[#allocation2 + $0x70] sm:$0xff] %v1480
        %1545 = vst [vmem:[#allocation2 + $0x78] sm:$0xff] %v1481
        %1546 = vst [vmem:[#allocation2 + $0x80] sm:$0xff] %v1482
        %1547 = vst [vmem:[#allocation2 + $0x88] sm:$0xff] %v1483
        %1548 = vst [vmem:[#allocation2 + $0x90] sm:$0xff] %v1484
        %1549 = vst [vmem:[#allocation2 + $0x98] sm:$0xff] %v1485
        %1550 = vst [vmem:[#allocation2 + $0xa0] sm:$0xff] %v1486
        %1551 = vst [vmem:[#allocation2 + $0xa8] sm:$0xff] %v1487
        %1552 = vst [vmem:[#allocation2 + $0xb0] sm:$0xff] %v1488
        %1553 = vst [vmem:[#allocation2 + $0xb8] sm:$0xff] %v1489
        %1554 = vst [vmem:[#allocation2 + $0xc0] sm:$0xff] %v1490
        %1555 = vst [vmem:[#allocation2 + $0xc8] sm:$0xff] %v1491
        %1556 = vst [vmem:[#allocation2 + $0xd0] sm:$0xff] %v1492
        %1557 = vst [vmem:[#allocation2 + $0xd8] sm:$0xff] %v1493
        %1558 = vst [vmem:[#allocation2 + $0xe0] sm:$0xff] %v1494
        %1559 = vst [vmem:[#allocation2 + $0xe8] sm:$0xff] %v1495
        %1560 = vst [vmem:[#allocation2 + $0xf0] sm:$0xff] %v1496
        %1561 = vst [vmem:[#allocation2 + $0xf8] sm:$0xff] %v1497
        %1562 = vst [vmem:[#allocation2 + $0x100] sm:$0xff] %v1498
        %1563 = vst [vmem:[#allocation2 + $0x108] sm:$0xff] %v1499
        %1564 = vst [vmem:[#allocation2 + $0x110] sm:$0xff] %v1500
        %1565 = vst [vmem:[#allocation2 + $0x118] sm:$0xff] %v1501
        %1566 = vst [vmem:[#allocation2 + $0x120] sm:$0xff] %v1502
        %1567 = vst [vmem:[#allocation2 + $0x128] sm:$0xff] %v1503
        %1568 = vst [vmem:[#allocation2 + $0x130] sm:$0xff] %v1504
        %1569 = vst [vmem:[#allocation2 + $0x138] sm:$0xff] %v1505
        %1570 = vst [vmem:[#allocation2 + $0x140] sm:$0xff] %v1506
        %1571 = vst [vmem:[#allocation2 + $0x148] sm:$0xff] %v1507
        %1572 = vst [vmem:[#allocation2 + $0x150] sm:$0xff] %v1508
        %1573 = vst [vmem:[#allocation2 + $0x158] sm:$0xff] %v1509
        %1574 = vst [vmem:[#allocation2 + $0x160] sm:$0xff] %v1510
        %1575 = vst [vmem:[#allocation2 + $0x168] sm:$0xff] %v1511
        %1576 = vst [vmem:[#allocation2 + $0x170] sm:$0xff] %v1512
        %1577 = vst [vmem:[#allocation2 + $0x178] sm:$0xff] %v1513
        %1578 = vst [vmem:[#allocation2 + $0x180] sm:$0xff] %v1514
        %1579 = vst [vmem:[#allocation2 + $0x188] sm:$0xff] %v1515
        %1580 = vst [vmem:[#allocation2 + $0x190] sm:$0xff] %v1516
        %1581 = vst [vmem:[#allocation2 + $0x198] sm:$0xff] %v1517
        %1582 = vst [vmem:[#allocation2 + $0x1a0] sm:$0xff] %v1518
        %1583 = vst [vmem:[#allocation2 + $0x1a8] sm:$0xff] %v1519
        %1584 = vst [vmem:[#allocation2 + $0x1b0] sm:$0xff] %v1520
        %1585 = vst [vmem:[#allocation2 + $0x1b8] sm:$0xff] %v1521
        %1586 = vst [vmem:[#allocation2 + $0x1c0] sm:$0xff] %v1522
        %1587 = vst [vmem:[#allocation2 + $0x1c8] sm:$0xff] %v1523
        %1588 = vst [vmem:[#allocation2 + $0x1d0] sm:$0xff] %v1524
        %1589 = vst [vmem:[#allocation2 + $0x1d8] sm:$0xff] %v1525
        %1590 = vst [vmem:[#allocation2 + $0x1e0] sm:$0xff] %v1526
        %1591 = vst [vmem:[#allocation2 + $0x1e8] sm:$0xff] %v1527
        %1592 = vst [vmem:[#allocation2 + $0x1f0] sm:$0xff] %v1528
        %1593 = vst [vmem:[#allocation2 + $0x1f8] sm:$0xff] %v1529
        // Predicated region
        $region53: #{tpu_custom_call.1} parent=35 // pred_check
          %p1594 = pneg %p340
        $region54: #{tpu_custom_call.1} parent=35 // pred_check_branch
          %1596 = sbr.rel (%p1594) target = $region56
        $region55: #{tpu_custom_call.1} parent=35 // pred_region
          %v1597 = vld [vmem:[#allocation2] sm:$0xff]
          %v1598 = vld [vmem:[#allocation2 + $0x8] sm:$0xff]
          %v1599 = vld [vmem:[#allocation2 + $0x10] sm:$0xff]
          %v1600 = vld [vmem:[#allocation2 + $0x18] sm:$0xff]
          %v1601 = vld [vmem:[#allocation2 + $0x20] sm:$0xff]
          %v1602 = vld [vmem:[#allocation2 + $0x28] sm:$0xff]
          %v1603 = vld [vmem:[#allocation2 + $0x30] sm:$0xff]
          %v1604 = vld [vmem:[#allocation2 + $0x38] sm:$0xff]
          %v1605 = vld [vmem:[#allocation2 + $0x40] sm:$0xff]
          %v1606 = vld [vmem:[#allocation2 + $0x48] sm:$0xff]
          %v1607 = vld [vmem:[#allocation2 + $0x50] sm:$0xff]
          %v1608 = vld [vmem:[#allocation2 + $0x58] sm:$0xff]
          %v1609 = vld [vmem:[#allocation2 + $0x60] sm:$0xff]
          %v1610 = vld [vmem:[#allocation2 + $0x68] sm:$0xff]
          %v1611 = vld [vmem:[#allocation2 + $0x70] sm:$0xff]
          %v1612 = vld [vmem:[#allocation2 + $0x78] sm:$0xff]
          %v1613 = vld [vmem:[#allocation2 + $0x80] sm:$0xff]
          %v1614 = vld [vmem:[#allocation2 + $0x88] sm:$0xff]
          %v1615 = vld [vmem:[#allocation2 + $0x90] sm:$0xff]
          %v1616 = vld [vmem:[#allocation2 + $0x98] sm:$0xff]
          %v1617 = vld [vmem:[#allocation2 + $0xa0] sm:$0xff]
          %v1618 = vld [vmem:[#allocation2 + $0xa8] sm:$0xff]
          %v1619 = vld [vmem:[#allocation2 + $0xb0] sm:$0xff]
          %v1620 = vld [vmem:[#allocation2 + $0xb8] sm:$0xff]
          %v1621 = vld [vmem:[#allocation2 + $0xc0] sm:$0xff]
          %v1622 = vld [vmem:[#allocation2 + $0xc8] sm:$0xff]
          %v1623 = vld [vmem:[#allocation2 + $0xd0] sm:$0xff]
          %v1624 = vld [vmem:[#allocation2 + $0xd8] sm:$0xff]
          %v1625 = vld [vmem:[#allocation2 + $0xe0] sm:$0xff]
          %v1626 = vld [vmem:[#allocation2 + $0xe8] sm:$0xff]
          %v1627 = vld [vmem:[#allocation2 + $0xf0] sm:$0xff]
          %v1628 = vld [vmem:[#allocation2 + $0xf8] sm:$0xff]
          %v1629 = vld [vmem:[#allocation2 + $0x100] sm:$0xff]
          %v1630 = vld [vmem:[#allocation2 + $0x108] sm:$0xff]
          %v1631 = vld [vmem:[#allocation2 + $0x110] sm:$0xff]
          %v1632 = vld [vmem:[#allocation2 + $0x118] sm:$0xff]
          %v1633 = vld [vmem:[#allocation2 + $0x120] sm:$0xff]
          %v1634 = vld [vmem:[#allocation2 + $0x128] sm:$0xff]
          %v1635 = vld [vmem:[#allocation2 + $0x130] sm:$0xff]
          %v1636 = vld [vmem:[#allocation2 + $0x138] sm:$0xff]
          %v1637 = vld [vmem:[#allocation2 + $0x140] sm:$0xff]
          %v1638 = vld [vmem:[#allocation2 + $0x148] sm:$0xff]
          %v1639 = vld [vmem:[#allocation2 + $0x150] sm:$0xff]
          %v1640 = vld [vmem:[#allocation2 + $0x158] sm:$0xff]
          %v1641 = vld [vmem:[#allocation2 + $0x160] sm:$0xff]
          %v1642 = vld [vmem:[#allocation2 + $0x168] sm:$0xff]
          %v1643 = vld [vmem:[#allocation2 + $0x170] sm:$0xff]
          %v1644 = vld [vmem:[#allocation2 + $0x178] sm:$0xff]
          %v1645 = vld [vmem:[#allocation2 + $0x180] sm:$0xff]
          %v1646 = vld [vmem:[#allocation2 + $0x188] sm:$0xff]
          %v1647 = vld [vmem:[#allocation2 + $0x190] sm:$0xff]
          %v1648 = vld [vmem:[#allocation2 + $0x198] sm:$0xff]
          %v1649 = vld [vmem:[#allocation2 + $0x1a0] sm:$0xff]
          %v1650 = vld [vmem:[#allocation2 + $0x1a8] sm:$0xff]
          %v1651 = vld [vmem:[#allocation2 + $0x1b0] sm:$0xff]
          %v1652 = vld [vmem:[#allocation2 + $0x1b8] sm:$0xff]
          %v1653 = vld [vmem:[#allocation2 + $0x1c0] sm:$0xff]
          %v1654 = vld [vmem:[#allocation2 + $0x1c8] sm:$0xff]
          %v1655 = vld [vmem:[#allocation2 + $0x1d0] sm:$0xff]
          %v1656 = vld [vmem:[#allocation2 + $0x1d8] sm:$0xff]
          %v1657 = vld [vmem:[#allocation2 + $0x1e0] sm:$0xff]
          %v1658 = vld [vmem:[#allocation2 + $0x1e8] sm:$0xff]
          %v1659 = vld [vmem:[#allocation2 + $0x1f0] sm:$0xff]
          %v1660 = vld [vmem:[#allocation2 + $0x1f8] sm:$0xff]
          %v1661 = vld [vmem:[%s333] sm:$0x3]
          %v1663 = vlaneseq
          %v1664 = vshrl.u32 %v1663, 7
          %v1665 = vsub.s32 0, %v1664
          %v1666 = vrot.slane %v1661, %v1665
          %v1667 = vlaneseq
          %v1668 = vshrl.u32 %v1667, 7
          %v1669 = vsub.s32 1, %v1668
          %v1670 = vrot.slane %v1661, %v1669
          %v1673 = vadd.f32 %v1597, %v1666
          %v1674 = vadd.f32 %v1598, %v1670
          %v1675 = vadd.f32 %v1599, %v1666
          %v1676 = vadd.f32 %v1600, %v1670
          %v1677 = vadd.f32 %v1601, %v1666
          %v1678 = vadd.f32 %v1602, %v1670
          %v1679 = vadd.f32 %v1603, %v1666
          %v1680 = vadd.f32 %v1604, %v1670
          %v1681 = vadd.f32 %v1605, %v1666
          %v1682 = vadd.f32 %v1606, %v1670
          %v1683 = vadd.f32 %v1607, %v1666
          %v1684 = vadd.f32 %v1608, %v1670
          %v1685 = vadd.f32 %v1609, %v1666
          %v1686 = vadd.f32 %v1610, %v1670
          %v1687 = vadd.f32 %v1611, %v1666
          %v1688 = vadd.f32 %v1612, %v1670
          %v1689 = vadd.f32 %v1613, %v1666
          %v1690 = vadd.f32 %v1614, %v1670
          %v1691 = vadd.f32 %v1615, %v1666
          %v1692 = vadd.f32 %v1616, %v1670
          %v1693 = vadd.f32 %v1617, %v1666
          %v1694 = vadd.f32 %v1618, %v1670
          %v1695 = vadd.f32 %v1619, %v1666
          %v1696 = vadd.f32 %v1620, %v1670
          %v1697 = vadd.f32 %v1621, %v1666
          %v1698 = vadd.f32 %v1622, %v1670
          %v1699 = vadd.f32 %v1623, %v1666
          %v1700 = vadd.f32 %v1624, %v1670
          %v1701 = vadd.f32 %v1625, %v1666
          %v1702 = vadd.f32 %v1626, %v1670
          %v1703 = vadd.f32 %v1627, %v1666
          %v1704 = vadd.f32 %v1628, %v1670
          %v1705 = vadd.f32 %v1629, %v1666
          %v1706 = vadd.f32 %v1630, %v1670
          %v1707 = vadd.f32 %v1631, %v1666
          %v1708 = vadd.f32 %v1632, %v1670
          %v1709 = vadd.f32 %v1633, %v1666
          %v1710 = vadd.f32 %v1634, %v1670
          %v1711 = vadd.f32 %v1635, %v1666
          %v1712 = vadd.f32 %v1636, %v1670
          %v1713 = vadd.f32 %v1637, %v1666
          %v1714 = vadd.f32 %v1638, %v1670
          %v1715 = vadd.f32 %v1639, %v1666
          %v1716 = vadd.f32 %v1640, %v1670
          %v1717 = vadd.f32 %v1641, %v1666
          %v1718 = vadd.f32 %v1642, %v1670
          %v1719 = vadd.f32 %v1643, %v1666
          %v1720 = vadd.f32 %v1644, %v1670
          %v1721 = vadd.f32 %v1645, %v1666
          %v1722 = vadd.f32 %v1646, %v1670
          %v1723 = vadd.f32 %v1647, %v1666
          %v1724 = vadd.f32 %v1648, %v1670
          %v1725 = vadd.f32 %v1649, %v1666
          %v1726 = vadd.f32 %v1650, %v1670
          %v1727 = vadd.f32 %v1651, %v1666
          %v1728 = vadd.f32 %v1652, %v1670
          %v1729 = vadd.f32 %v1653, %v1666
          %v1730 = vadd.f32 %v1654, %v1670
          %v1731 = vadd.f32 %v1655, %v1666
          %v1732 = vadd.f32 %v1656, %v1670
          %v1733 = vadd.f32 %v1657, %v1666
          %v1734 = vadd.f32 %v1658, %v1670
          %v1735 = vadd.f32 %v1659, %v1666
          %v1736 = vadd.f32 %v1660, %v1670
          %v1737 = vld [vmem:[%s292] sm:$0xff]
          %v1738 = vld [vmem:[%s292 + $0x8] sm:$0xff]
          %v1739 = vld [vmem:[%s292 + $0x10] sm:$0xff]
          %v1740 = vld [vmem:[%s292 + $0x18] sm:$0xff]
          %v1741 = vld [vmem:[%s292 + $0x20] sm:$0xff]
          %v1742 = vld [vmem:[%s292 + $0x28] sm:$0xff]
          %v1743 = vld [vmem:[%s292 + $0x30] sm:$0xff]
          %v1744 = vld [vmem:[%s292 + $0x38] sm:$0xff]
          %v1745 = vld [vmem:[%s292 + $0x40] sm:$0xff]
          %v1746 = vld [vmem:[%s292 + $0x48] sm:$0xff]
          %v1747 = vld [vmem:[%s292 + $0x50] sm:$0xff]
          %v1748 = vld [vmem:[%s292 + $0x58] sm:$0xff]
          %v1749 = vld [vmem:[%s292 + $0x60] sm:$0xff]
          %v1750 = vld [vmem:[%s292 + $0x68] sm:$0xff]
          %v1751 = vld [vmem:[%s292 + $0x70] sm:$0xff]
          %v1752 = vld [vmem:[%s292 + $0x78] sm:$0xff]
          %v1753 = vld [vmem:[%s292 + $0x80] sm:$0xff]
          %v1754 = vld [vmem:[%s292 + $0x88] sm:$0xff]
          %v1755 = vld [vmem:[%s292 + $0x90] sm:$0xff]
          %v1756 = vld [vmem:[%s292 + $0x98] sm:$0xff]
          %v1757 = vld [vmem:[%s292 + $0xa0] sm:$0xff]
          %v1758 = vld [vmem:[%s292 + $0xa8] sm:$0xff]
          %v1759 = vld [vmem:[%s292 + $0xb0] sm:$0xff]
          %v1760 = vld [vmem:[%s292 + $0xb8] sm:$0xff]
          %v1761 = vld [vmem:[%s292 + $0xc0] sm:$0xff]
          %v1762 = vld [vmem:[%s292 + $0xc8] sm:$0xff]
          %v1763 = vld [vmem:[%s292 + $0xd0] sm:$0xff]
          %v1764 = vld [vmem:[%s292 + $0xd8] sm:$0xff]
          %v1765 = vld [vmem:[%s292 + $0xe0] sm:$0xff]
          %v1766 = vld [vmem:[%s292 + $0xe8] sm:$0xff]
          %v1767 = vld [vmem:[%s292 + $0xf0] sm:$0xff]
          %v1768 = vld [vmem:[%s292 + $0xf8] sm:$0xff]
          %v1769 = vunpack.c.l.bf16 %v1737
          %v1770 = vunpack.c.h.bf16 %v1737
          %v1771 = vunpack.c.l.bf16 %v1738
          %v1772 = vunpack.c.h.bf16 %v1738
          %v1773 = vunpack.c.l.bf16 %v1739
          %v1774 = vunpack.c.h.bf16 %v1739
          %v1775 = vunpack.c.l.bf16 %v1740
          %v1776 = vunpack.c.h.bf16 %v1740
          %v1777 = vunpack.c.l.bf16 %v1741
          %v1778 = vunpack.c.h.bf16 %v1741
          %v1779 = vunpack.c.l.bf16 %v1742
          %v1780 = vunpack.c.h.bf16 %v1742
          %v1781 = vunpack.c.l.bf16 %v1743
          %v1782 = vunpack.c.h.bf16 %v1743
          %v1783 = vunpack.c.l.bf16 %v1744
          %v1784 = vunpack.c.h.bf16 %v1744
          %v1785 = vunpack.c.l.bf16 %v1745
          %v1786 = vunpack.c.h.bf16 %v1745
          %v1787 = vunpack.c.l.bf16 %v1746
          %v1788 = vunpack.c.h.bf16 %v1746
          %v1789 = vunpack.c.l.bf16 %v1747
          %v1790 = vunpack.c.h.bf16 %v1747
          %v1791 = vunpack.c.l.bf16 %v1748
          %v1792 = vunpack.c.h.bf16 %v1748
          %v1793 = vunpack.c.l.bf16 %v1749
          %v1794 = vunpack.c.h.bf16 %v1749
          %v1795 = vunpack.c.l.bf16 %v1750
          %v1796 = vunpack.c.h.bf16 %v1750
          %v1797 = vunpack.c.l.bf16 %v1751
          %v1798 = vunpack.c.h.bf16 %v1751
          %v1799 = vunpack.c.l.bf16 %v1752
          %v1800 = vunpack.c.h.bf16 %v1752
          %v1801 = vunpack.c.l.bf16 %v1753
          %v1802 = vunpack.c.h.bf16 %v1753
          %v1803 = vunpack.c.l.bf16 %v1754
          %v1804 = vunpack.c.h.bf16 %v1754
          %v1805 = vunpack.c.l.bf16 %v1755
          %v1806 = vunpack.c.h.bf16 %v1755
          %v1807 = vunpack.c.l.bf16 %v1756
          %v1808 = vunpack.c.h.bf16 %v1756
          %v1809 = vunpack.c.l.bf16 %v1757
          %v1810 = vunpack.c.h.bf16 %v1757
          %v1811 = vunpack.c.l.bf16 %v1758
          %v1812 = vunpack.c.h.bf16 %v1758
          %v1813 = vunpack.c.l.bf16 %v1759
          %v1814 = vunpack.c.h.bf16 %v1759
          %v1815 = vunpack.c.l.bf16 %v1760
          %v1816 = vunpack.c.h.bf16 %v1760
          %v1817 = vunpack.c.l.bf16 %v1761
          %v1818 = vunpack.c.h.bf16 %v1761
          %v1819 = vunpack.c.l.bf16 %v1762
          %v1820 = vunpack.c.h.bf16 %v1762
          %v1821 = vunpack.c.l.bf16 %v1763
          %v1822 = vunpack.c.h.bf16 %v1763
          %v1823 = vunpack.c.l.bf16 %v1764
          %v1824 = vunpack.c.h.bf16 %v1764
          %v1825 = vunpack.c.l.bf16 %v1765
          %v1826 = vunpack.c.h.bf16 %v1765
          %v1827 = vunpack.c.l.bf16 %v1766
          %v1828 = vunpack.c.h.bf16 %v1766
          %v1829 = vunpack.c.l.bf16 %v1767
          %v1830 = vunpack.c.h.bf16 %v1767
          %v1831 = vunpack.c.l.bf16 %v1768
          %v1832 = vunpack.c.h.bf16 %v1768
          %v1833 = vadd.f32 %v1673, %v1769
          %v1834 = vadd.f32 %v1674, %v1770
          %v1835 = vadd.f32 %v1675, %v1771
          %v1836 = vadd.f32 %v1676, %v1772
          %v1837 = vadd.f32 %v1677, %v1773
          %v1838 = vadd.f32 %v1678, %v1774
          %v1839 = vadd.f32 %v1679, %v1775
          %v1840 = vadd.f32 %v1680, %v1776
          %v1841 = vadd.f32 %v1681, %v1777
          %v1842 = vadd.f32 %v1682, %v1778
          %v1843 = vadd.f32 %v1683, %v1779
          %v1844 = vadd.f32 %v1684, %v1780
          %v1845 = vadd.f32 %v1685, %v1781
          %v1846 = vadd.f32 %v1686, %v1782
          %v1847 = vadd.f32 %v1687, %v1783
          %v1848 = vadd.f32 %v1688, %v1784
          %v1849 = vadd.f32 %v1689, %v1785
          %v1850 = vadd.f32 %v1690, %v1786
          %v1851 = vadd.f32 %v1691, %v1787
          %v1852 = vadd.f32 %v1692, %v1788
          %v1853 = vadd.f32 %v1693, %v1789
          %v1854 = vadd.f32 %v1694, %v1790
          %v1855 = vadd.f32 %v1695, %v1791
          %v1856 = vadd.f32 %v1696, %v1792
          %v1857 = vadd.f32 %v1697, %v1793
          %v1858 = vadd.f32 %v1698, %v1794
          %v1859 = vadd.f32 %v1699, %v1795
          %v1860 = vadd.f32 %v1700, %v1796
          %v1861 = vadd.f32 %v1701, %v1797
          %v1862 = vadd.f32 %v1702, %v1798
          %v1863 = vadd.f32 %v1703, %v1799
          %v1864 = vadd.f32 %v1704, %v1800
          %v1865 = vadd.f32 %v1705, %v1801
          %v1866 = vadd.f32 %v1706, %v1802
          %v1867 = vadd.f32 %v1707, %v1803
          %v1868 = vadd.f32 %v1708, %v1804
          %v1869 = vadd.f32 %v1709, %v1805
          %v1870 = vadd.f32 %v1710, %v1806
          %v1871 = vadd.f32 %v1711, %v1807
          %v1872 = vadd.f32 %v1712, %v1808
          %v1873 = vadd.f32 %v1713, %v1809
          %v1874 = vadd.f32 %v1714, %v1810
          %v1875 = vadd.f32 %v1715, %v1811
          %v1876 = vadd.f32 %v1716, %v1812
          %v1877 = vadd.f32 %v1717, %v1813
          %v1878 = vadd.f32 %v1718, %v1814
          %v1879 = vadd.f32 %v1719, %v1815
          %v1880 = vadd.f32 %v1720, %v1816
          %v1881 = vadd.f32 %v1721, %v1817
          %v1882 = vadd.f32 %v1722, %v1818
          %v1883 = vadd.f32 %v1723, %v1819
          %v1884 = vadd.f32 %v1724, %v1820
          %v1885 = vadd.f32 %v1725, %v1821
          %v1886 = vadd.f32 %v1726, %v1822
          %v1887 = vadd.f32 %v1727, %v1823
          %v1888 = vadd.f32 %v1728, %v1824
          %v1889 = vadd.f32 %v1729, %v1825
          %v1890 = vadd.f32 %v1730, %v1826
          %v1891 = vadd.f32 %v1731, %v1827
          %v1892 = vadd.f32 %v1732, %v1828
          %v1893 = vadd.f32 %v1733, %v1829
          %v1894 = vadd.f32 %v1734, %v1830
          %v1895 = vadd.f32 %v1735, %v1831
          %v1896 = vadd.f32 %v1736, %v1832
          %v1897 = vmax.f32 %v1833, 0.0
          %v1898 = vmax.f32 %v1834, 0.0
          %v1899 = vmax.f32 %v1835, 0.0
          %v1900 = vmax.f32 %v1836, 0.0
          %v1901 = vmax.f32 %v1837, 0.0
          %v1902 = vmax.f32 %v1838, 0.0
          %v1903 = vmax.f32 %v1839, 0.0
          %v1904 = vmax.f32 %v1840, 0.0
          %v1905 = vmax.f32 %v1841, 0.0
          %v1906 = vmax.f32 %v1842, 0.0
          %v1907 = vmax.f32 %v1843, 0.0
          %v1908 = vmax.f32 %v1844, 0.0
          %v1909 = vmax.f32 %v1845, 0.0
          %v1910 = vmax.f32 %v1846, 0.0
          %v1911 = vmax.f32 %v1847, 0.0
          %v1912 = vmax.f32 %v1848, 0.0
          %v1913 = vmax.f32 %v1849, 0.0
          %v1914 = vmax.f32 %v1850, 0.0
          %v1915 = vmax.f32 %v1851, 0.0
          %v1916 = vmax.f32 %v1852, 0.0
          %v1917 = vmax.f32 %v1853, 0.0
          %v1918 = vmax.f32 %v1854, 0.0
          %v1919 = vmax.f32 %v1855, 0.0
          %v1920 = vmax.f32 %v1856, 0.0
          %v1921 = vmax.f32 %v1857, 0.0
          %v1922 = vmax.f32 %v1858, 0.0
          %v1923 = vmax.f32 %v1859, 0.0
          %v1924 = vmax.f32 %v1860, 0.0
          %v1925 = vmax.f32 %v1861, 0.0
          %v1926 = vmax.f32 %v1862, 0.0
          %v1927 = vmax.f32 %v1863, 0.0
          %v1928 = vmax.f32 %v1864, 0.0
          %v1929 = vmax.f32 %v1865, 0.0
          %v1930 = vmax.f32 %v1866, 0.0
          %v1931 = vmax.f32 %v1867, 0.0
          %v1932 = vmax.f32 %v1868, 0.0
          %v1933 = vmax.f32 %v1869, 0.0
          %v1934 = vmax.f32 %v1870, 0.0
          %v1935 = vmax.f32 %v1871, 0.0
          %v1936 = vmax.f32 %v1872, 0.0
          %v1937 = vmax.f32 %v1873, 0.0
          %v1938 = vmax.f32 %v1874, 0.0
          %v1939 = vmax.f32 %v1875, 0.0
          %v1940 = vmax.f32 %v1876, 0.0
          %v1941 = vmax.f32 %v1877, 0.0
          %v1942 = vmax.f32 %v1878, 0.0
          %v1943 = vmax.f32 %v1879, 0.0
          %v1944 = vmax.f32 %v1880, 0.0
          %v1945 = vmax.f32 %v1881, 0.0
          %v1946 = vmax.f32 %v1882, 0.0
          %v1947 = vmax.f32 %v1883, 0.0
          %v1948 = vmax.f32 %v1884, 0.0
          %v1949 = vmax.f32 %v1885, 0.0
          %v1950 = vmax.f32 %v1886, 0.0
          %v1951 = vmax.f32 %v1887, 0.0
          %v1952 = vmax.f32 %v1888, 0.0
          %v1953 = vmax.f32 %v1889, 0.0
          %v1954 = vmax.f32 %v1890, 0.0
          %v1955 = vmax.f32 %v1891, 0.0
          %v1956 = vmax.f32 %v1892, 0.0
          %v1957 = vmax.f32 %v1893, 0.0
          %v1958 = vmax.f32 %v1894, 0.0
          %v1959 = vmax.f32 %v1895, 0.0
          %v1960 = vmax.f32 %v1896, 0.0
          %v1961 = vpack.c.bf16 %v1899, %v1897
          %v1962 = vpack.c.bf16 %v1900, %v1898
          %v1963 = vpack.c.bf16 %v1903, %v1901
          %v1964 = vpack.c.bf16 %v1904, %v1902
          %v1965 = vpack.c.bf16 %v1907, %v1905
          %v1966 = vpack.c.bf16 %v1908, %v1906
          %v1967 = vpack.c.bf16 %v1911, %v1909
          %v1968 = vpack.c.bf16 %v1912, %v1910
          %v1969 = vpack.c.bf16 %v1915, %v1913
          %v1970 = vpack.c.bf16 %v1916, %v1914
          %v1971 = vpack.c.bf16 %v1919, %v1917
          %v1972 = vpack.c.bf16 %v1920, %v1918
          %v1973 = vpack.c.bf16 %v1923, %v1921
          %v1974 = vpack.c.bf16 %v1924, %v1922
          %v1975 = vpack.c.bf16 %v1927, %v1925
          %v1976 = vpack.c.bf16 %v1928, %v1926
          %v1977 = vpack.c.bf16 %v1931, %v1929
          %v1978 = vpack.c.bf16 %v1932, %v1930
          %v1979 = vpack.c.bf16 %v1935, %v1933
          %v1980 = vpack.c.bf16 %v1936, %v1934
          %v1981 = vpack.c.bf16 %v1939, %v1937
          %v1982 = vpack.c.bf16 %v1940, %v1938
          %v1983 = vpack.c.bf16 %v1943, %v1941
          %v1984 = vpack.c.bf16 %v1944, %v1942
          %v1985 = vpack.c.bf16 %v1947, %v1945
          %v1986 = vpack.c.bf16 %v1948, %v1946
          %v1987 = vpack.c.bf16 %v1951, %v1949
          %v1988 = vpack.c.bf16 %v1952, %v1950
          %v1989 = vpack.c.bf16 %v1955, %v1953
          %v1990 = vpack.c.bf16 %v1956, %v1954
          %v1991 = vpack.c.bf16 %v1959, %v1957
          %v1992 = vpack.c.bf16 %v1960, %v1958
          %v2025 = vunpack.c.l.b16 %v1961
          %v2026 = vunpack.c.l.b16 %v1962
          %v2027 = vunpack.c.h.b16 %v1961
          %v2028 = vunpack.c.h.b16 %v1962
          %v2029 = vunpack.c.l.b16 %v1963
          %v2030 = vunpack.c.l.b16 %v1964
          %v2031 = vunpack.c.h.b16 %v1963
          %v2032 = vunpack.c.h.b16 %v1964
          %v2033 = vunpack.c.l.b16 %v1965
          %v2034 = vunpack.c.l.b16 %v1966
          %v2035 = vunpack.c.h.b16 %v1965
          %v2036 = vunpack.c.h.b16 %v1966
          %v2037 = vunpack.c.l.b16 %v1967
          %v2038 = vunpack.c.l.b16 %v1968
          %v2039 = vunpack.c.h.b16 %v1967
          %v2040 = vunpack.c.h.b16 %v1968
          %v2041 = vunpack.c.l.b16 %v1969
          %v2042 = vunpack.c.l.b16 %v1970
          %v2043 = vunpack.c.h.b16 %v1969
          %v2044 = vunpack.c.h.b16 %v1970
          %v2045 = vunpack.c.l.b16 %v1971
          %v2046 = vunpack.c.l.b16 %v1972
          %v2047 = vunpack.c.h.b16 %v1971
          %v2048 = vunpack.c.h.b16 %v1972
          %v2049 = vunpack.c.l.b16 %v1973
          %v2050 = vunpack.c.l.b16 %v1974
          %v2051 = vunpack.c.h.b16 %v1973
          %v2052 = vunpack.c.h.b16 %v1974
          %v2053 = vunpack.c.l.b16 %v1975
          %v2054 = vunpack.c.l.b16 %v1976
          %v2055 = vunpack.c.h.b16 %v1975
          %v2056 = vunpack.c.h.b16 %v1976
          %v2057 = vunpack.c.l.b16 %v1977
          %v2058 = vunpack.c.l.b16 %v1978
          %v2059 = vunpack.c.h.b16 %v1977
          %v2060 = vunpack.c.h.b16 %v1978
          %v2061 = vunpack.c.l.b16 %v1979
          %v2062 = vunpack.c.l.b16 %v1980
          %v2063 = vunpack.c.h.b16 %v1979
          %v2064 = vunpack.c.h.b16 %v1980
          %v2065 = vunpack.c.l.b16 %v1981
          %v2066 = vunpack.c.l.b16 %v1982
          %v2067 = vunpack.c.h.b16 %v1981
          %v2068 = vunpack.c.h.b16 %v1982
          %v2069 = vunpack.c.l.b16 %v1983
          %v2070 = vunpack.c.l.b16 %v1984
          %v2071 = vunpack.c.h.b16 %v1983
          %v2072 = vunpack.c.h.b16 %v1984
          %v2073 = vunpack.c.l.b16 %v1985
          %v2074 = vunpack.c.l.b16 %v1986
          %v2075 = vunpack.c.h.b16 %v1985
          %v2076 = vunpack.c.h.b16 %v1986
          %v2077 = vunpack.c.l.b16 %v1987
          %v2078 = vunpack.c.l.b16 %v1988
          %v2079 = vunpack.c.h.b16 %v1987
          %v2080 = vunpack.c.h.b16 %v1988
          %v2081 = vunpack.c.l.b16 %v1989
          %v2082 = vunpack.c.l.b16 %v1990
          %v2083 = vunpack.c.h.b16 %v1989
          %v2084 = vunpack.c.h.b16 %v1990
          %v2085 = vunpack.c.l.b16 %v1991
          %v2086 = vunpack.c.l.b16 %v1992
          %v2087 = vunpack.c.h.b16 %v1991
          %v2088 = vunpack.c.h.b16 %v1992
          %v2089 = vpack.c.b16 %v2026, %v2025
          %v2090 = vpack.c.b16 %v2028, %v2027
          %v2091 = vpack.c.b16 %v2030, %v2029
          %v2092 = vpack.c.b16 %v2032, %v2031
          %v2093 = vpack.c.b16 %v2034, %v2033
          %v2094 = vpack.c.b16 %v2036, %v2035
          %v2095 = vpack.c.b16 %v2038, %v2037
          %v2096 = vpack.c.b16 %v2040, %v2039
          %v2097 = vpack.c.b16 %v2042, %v2041
          %v2098 = vpack.c.b16 %v2044, %v2043
          %v2099 = vpack.c.b16 %v2046, %v2045
          %v2100 = vpack.c.b16 %v2048, %v2047
          %v2101 = vpack.c.b16 %v2050, %v2049
          %v2102 = vpack.c.b16 %v2052, %v2051
          %v2103 = vpack.c.b16 %v2054, %v2053
          %v2104 = vpack.c.b16 %v2056, %v2055
          %v2105 = vpack.c.b16 %v2058, %v2057
          %v2106 = vpack.c.b16 %v2060, %v2059
          %v2107 = vpack.c.b16 %v2062, %v2061
          %v2108 = vpack.c.b16 %v2064, %v2063
          %v2109 = vpack.c.b16 %v2066, %v2065
          %v2110 = vpack.c.b16 %v2068, %v2067
          %v2111 = vpack.c.b16 %v2070, %v2069
          %v2112 = vpack.c.b16 %v2072, %v2071
          %v2113 = vpack.c.b16 %v2074, %v2073
          %v2114 = vpack.c.b16 %v2076, %v2075
          %v2115 = vpack.c.b16 %v2078, %v2077
          %v2116 = vpack.c.b16 %v2080, %v2079
          %v2117 = vpack.c.b16 %v2082, %v2081
          %v2118 = vpack.c.b16 %v2084, %v2083
          %v2119 = vpack.c.b16 %v2086, %v2085
          %v2120 = vpack.c.b16 %v2088, %v2087
          %2153 = vst [vmem:[%s325] sm:$0xff] %v2089
          %2154 = vst [vmem:[%s325 + $0x8] sm:$0xff] %v2090
          %2155 = vst [vmem:[%s325 + $0x10] sm:$0xff] %v2091
          %2156 = vst [vmem:[%s325 + $0x18] sm:$0xff] %v2092
          %2157 = vst [vmem:[%s325 + $0x20] sm:$0xff] %v2093
          %2158 = vst [vmem:[%s325 + $0x28] sm:$0xff] %v2094
          %2159 = vst [vmem:[%s325 + $0x30] sm:$0xff] %v2095
          %2160 = vst [vmem:[%s325 + $0x38] sm:$0xff] %v2096
          %2161 = vst [vmem:[%s325 + $0x40] sm:$0xff] %v2097
          %2162 = vst [vmem:[%s325 + $0x48] sm:$0xff] %v2098
          %2163 = vst [vmem:[%s325 + $0x50] sm:$0xff] %v2099
          %2164 = vst [vmem:[%s325 + $0x58] sm:$0xff] %v2100
          %2165 = vst [vmem:[%s325 + $0x60] sm:$0xff] %v2101
          %2166 = vst [vmem:[%s325 + $0x68] sm:$0xff] %v2102
          %2167 = vst [vmem:[%s325 + $0x70] sm:$0xff] %v2103
          %2168 = vst [vmem:[%s325 + $0x78] sm:$0xff] %v2104
          %2169 = vst [vmem:[%s325 + $0x80] sm:$0xff] %v2105
          %2170 = vst [vmem:[%s325 + $0x88] sm:$0xff] %v2106
          %2171 = vst [vmem:[%s325 + $0x90] sm:$0xff] %v2107
          %2172 = vst [vmem:[%s325 + $0x98] sm:$0xff] %v2108
          %2173 = vst [vmem:[%s325 + $0xa0] sm:$0xff] %v2109
          %2174 = vst [vmem:[%s325 + $0xa8] sm:$0xff] %v2110
          %2175 = vst [vmem:[%s325 + $0xb0] sm:$0xff] %v2111
          %2176 = vst [vmem:[%s325 + $0xb8] sm:$0xff] %v2112
          %2177 = vst [vmem:[%s325 + $0xc0] sm:$0xff] %v2113
          %2178 = vst [vmem:[%s325 + $0xc8] sm:$0xff] %v2114
          %2179 = vst [vmem:[%s325 + $0xd0] sm:$0xff] %v2115
          %2180 = vst [vmem:[%s325 + $0xd8] sm:$0xff] %v2116
          %2181 = vst [vmem:[%s325 + $0xe0] sm:$0xff] %v2117
          %2182 = vst [vmem:[%s325 + $0xe8] sm:$0xff] %v2118
          %2183 = vst [vmem:[%s325 + $0xf0] sm:$0xff] %v2119
          %2184 = vst [vmem:[%s325 + $0xf8] sm:$0xff] %v2120
        $region56: #{tpu_custom_call.1} parent=35 // pred_fallthru
          _
        %s2185 = sand.u32 %s161, 1
        %s2186 = scalar_lea.sflag [#allocation5], %s2185
        %s2187 = sand.u32 %s161, 1
        %s2188 = smul.addr %s2187, 256
        %s2189 = scalar_lea.vmem [#allocation9], %s2188
        // Predicated region
        $region57: #{tpu_custom_call.1} parent=35 // pred_check
          %p2190 = pneg %p171
        $region58: #{tpu_custom_call.1} parent=35 // pred_check_branch
          %2192 = sbr.rel (%p2190) target = $region60
        $region59: #{tpu_custom_call.1} parent=35 // pred_region
          %s2193 = smul.u32 32, %s27
          %s2194 = smul.u32 2, %s28
          %s2196 = ssub.s32 4096, 4096
          %2197 = vsyncadd %s2186, %s2196
          %s2198 = smul.addr %s2193, 2
          %s2199 = sadd.s32 %s2194, %s2198
          %s2200 = smul.addr %s2199, 64
          %s2201 = scalar_lea.hbm %s4, %s2200
          %s2202 = sshll.u32 %s2189, 4
          %s2203 = int_to_ptr.vmem [resolvable:$true] %s2202
          %2208 = dma.vmem_to_hbm [thread:$0]  %s2203, 4096, %s2201, %s2186, 128, 128, 8
        $region60: #{tpu_custom_call.1} parent=35 // pred_fallthru
          _
      $region36: #{tpu_custom_call.1} parent=5 // pred_fallthru
        _
      %p2209 = scmp.le.s32.totalorder 2, %s17
      // Predicated region
      $region61: #{tpu_custom_call.1} parent=5 // pred_check
        %p2210 = pneg %p2209
      $region62: #{tpu_custom_call.1} parent=5 // pred_check_branch
        %2212 = sbr.rel (%p2210) target = $region64
      $region63: #{tpu_custom_call.1} parent=5 // pred_region
        %s2213 = ssub.s32 %s17, 2
        // Predicated region
        $region65: #{tpu_custom_call.1} parent=63 // pred_check
          %p2214 = pneg %p177
        $region66: #{tpu_custom_call.1} parent=63 // pred_check_branch
          %2216 = sbr.rel (%p2214) target = $region68
        $region67: #{tpu_custom_call.1} parent=63 // pred_region
          %s2217 = sand.u32 %s162, 1
          %s2218 = scalar_lea.sflag [#allocation5], %s2217
          %s2219 = sand.u32 %s162, 1
          %s2220 = smul.addr %s2219, 256
          %s2221 = scalar_lea.vmem [#allocation9], %s2220
          %2222 = dma.done %s2218, 4096
        $region68: #{tpu_custom_call.1} parent=63 // pred_fallthru
          _
      $region64: #{tpu_custom_call.1} parent=5 // pred_fallthru
        _
    $region6: #{tpu_custom_call.1} parent=1 // loop_footer
      %s21 = sadd.s32 1, %s17
    $region7: #{tpu_custom_call.1} parent=1 // loop_footer_branch
      %16 = sbr.rel target = $region3
    $region8: #{tpu_custom_call.1} parent=1 // loop_exit
      _
    %2223 = vsyncpa [#allocation4], 1
    %s2224 = scalar_lea.sflag [#allocation4], 1
    %2225 = vsyncpa %s2224, 1
    %2226 = vsyncpa [#allocation7], 1
    %2227 = vsyncpa [#allocation5], 1
    %s2228 = scalar_lea.sflag [#allocation5], 1
    %2229 = vsyncpa %s2228, 1

</llo_original>
